<compile_context>
chip_gen: v7x
topology: tpu7x:2x2x1
jax: 0.10.0
libtpu: 0.0.40
codegen_flags: <defaults>
</compile_context>

<pallas_src>
import jax
import jax.numpy as jnp
from jax.experimental import pallas as pl
from jax.experimental.pallas import tpu as pltpu

NUM_FEATURES = 4     # `num_features` global in the reference module
SEQ = 24             # forward() implies seq len 24 (24 -> 12 -> 6 -> 3, fc1 = 128*3)
BATCH = 2
BN_EPS = 1e-5


def netdisc_kernel(x_ref,
                   w1a, w1b, w1c, s1,
                   w2a, w2b, w2c, s2,
                   w3a, w3b, w3c, s3,
                   wf1a, wf1b, wf1c, bf1,
                   wf2, bf2,
                   out_ref):
    # x_ref: (SEQ, bt, F) position-major, batch-minor.

    def conv_bn_relu(x, wa_ref, wb_ref, wc_ref, s_ref):
        # x: (L, bt, Cin).  Conv1d(k=3, pad=1) as three tap matmuls; BN+bias folded.
        L, b, cin = x.shape
        zero = jnp.zeros((1, b, cin), jnp.float32)
        up = jnp.concatenate([zero, x[:L - 1]], axis=0)    # x[pos-1], zero pad at pos 0
        dn = jnp.concatenate([x[1:], zero], axis=0)        # x[pos+1], zero pad at pos L-1
        m = L * b                                          # bt % 8 == 0 -> layout no-op
        y = (jnp.dot(up.reshape(m, cin), wa_ref[...], preferred_element_type=jnp.float32)
             + jnp.dot(x.reshape(m, cin), wb_ref[...], preferred_element_type=jnp.float32)
             + jnp.dot(dn.reshape(m, cin), wc_ref[...], preferred_element_type=jnp.float32))
        y = jnp.maximum(y + s_ref[...], 0.0)               # folded BN shift + ReLU
        return y.reshape(L, b, y.shape[1])

    def maxpool2(y):
        # MaxPool1d(2) over the position (leading) dim: aligned reshape + elementwise max.
        L, b, c = y.shape
        y = y.reshape(L // 2, 2, b, c)
        return jnp.maximum(y[:, 0], y[:, 1])               # (L//2, bt, C)

    x = x_ref[...].astype(jnp.float32)                     # (24, bt, 4)
    y = maxpool2(conv_bn_relu(x, w1a, w1b, w1c, s1))       # (12, bt, 32)
    y = maxpool2(conv_bn_relu(y, w2a, w2b, w2c, s2))       # (6,  bt, 64)
    y = maxpool2(conv_bn_relu(y, w3a, w3b, w3c, s3))       # (3,  bt, 128)

    # fc1: three (bt,128)@(128,64) dot-accumulates against per-position wf1 slabs
    # (PyTorch flat index = c*3 + l; wf1 pre-split per l in the wrapper).
    h = (jnp.dot(y[0], wf1a[...], preferred_element_type=jnp.float32)
         + jnp.dot(y[1], wf1b[...], preferred_element_type=jnp.float32)
         + jnp.dot(y[2], wf1c[...], preferred_element_type=jnp.float32)
         + bf1[...])
    # Dropout(0.5): identity in eval mode.
    h = jnp.maximum(h, 0.0)                                # ReLU
    o = jnp.dot(h, wf2[...], preferred_element_type=jnp.float32) + bf2[...]
    out_ref[...] = jax.nn.sigmoid(o).astype(out_ref.dtype)  # (bt, F) only


def _round_up(n, m):
    return ((n + m - 1) // m) * m


def netdisc_forward(x, kparams, *, batch_block=None, vmem_limit_bytes=48 * 1024 * 1024):
    B = x.shape[0]
    if batch_block is not None:
        bt = _round_up(batch_block, 8)
    elif B <= 8:
        bt = 8                                             # one tiny block, padded to 8
    else:
        # Large blocks amortize ~0.35us/step and fill MXU rows; >=2 blocks keep the
        # "parallel" axis shardable across v7x's two TensorCores.  Per-block
        # intermediates are ~30 KB/seq, so bt=256 stays far inside VMEM on all gens.
        bt = min(256, _round_up(pl.cdiv(B, 2), 8))
    n_blocks = pl.cdiv(B, bt)
    B_pad = n_blocks * bt
    if B_pad != B:
        x = jnp.concatenate(
            [x, jnp.zeros((B_pad - B,) + x.shape[1:], x.dtype)], axis=0)

    # Position-major, batch-minor: (SEQ, B_pad, F).  Pool / fc1 gather become
    # leading-dim ops in the kernel; the conv neighbour shift is one whole (bt, C)
    # slab (sublane-tile aligned since bt % 8 == 0).
    x_pm = jnp.transpose(x, (1, 0, 2))

    def full_spec(arr):
        return pl.BlockSpec(arr.shape, lambda g, n=arr.ndim: (0,) * n)

    in_specs = [pl.BlockSpec((SEQ, bt, NUM_FEATURES), lambda g: (0, g, 0))]
    in_specs += [full_spec(p) for p in kparams]

    out = pl.pallas_call(
        netdisc_kernel,
        out_shape=jax.ShapeDtypeStruct((B_pad, NUM_FEATURES), jnp.float32),
        grid=(n_blocks,),
        in_specs=in_specs,
        out_specs=pl.BlockSpec((bt, NUM_FEATURES), lambda g: (g, 0)),
        compiler_params=pltpu.CompilerParams(
            dimension_semantics=("parallel",),
            vmem_limit_bytes=vmem_limit_bytes),
    )(x_pm, *kparams)

    out = out[:B]
    # unsqueeze(1).repeat(1, 24, 1): free broadcast outside the kernel.
    return jnp.broadcast_to(out[:, None, :], (B, SEQ, NUM_FEATURES))


# ----------------------------------------------------------------------------
# Deterministic parameter construction (PyTorch shapes) + conversion to kernel
# layout (BN/bias folded, conv weights split per tap, wf1 split per position),
# plus a plain-JAX reference for validation.
# ----------------------------------------------------------------------------
def make_pt_params(key):
    ks = jax.random.split(key, 32)
    i = iter(range(32))
    n = lambda shape, scale=0.1: scale * jax.random.normal(ks[next(i)], shape, jnp.float32)

    def bn(c):
        gamma = 1.0 + n((c,))
        beta = n((c,))
        mean = n((c,))
        var = 0.5 + jax.random.uniform(ks[next(i)], (c,), jnp.float32)
        return gamma, beta, mean, var

    p = {}
    p["w1"], p["cb1"] = n((32, NUM_FEATURES, 3)), n((32,))
    p["bn1"] = bn(32)
    p["w2"], p["cb2"] = n((64, 32, 3)), n((64,))
    p["bn2"] = bn(64)
    p["w3"], p["cb3"] = n((128, 64, 3)), n((128,))
    p["bn3"] = bn(128)
    p["wf1"], p["bf1"] = n((64, 128 * 3)), n((64,))
    p["wf2"], p["bf2"] = n((NUM_FEATURES, 64)), n((NUM_FEATURES,))
    return p


def to_kernel_params(p):
    def conv(w_pt, cb, bnp):
        # w_pt: (Cout, Cin, 3); tap k multiplies x[pos + k - 1].
        gamma, beta, mean, var = bnp
        scale = gamma / jnp.sqrt(var + BN_EPS)                          # (Cout,)
        taps = [w_pt[:, :, k].T * scale[None, :] for k in range(3)]     # 3 x (Cin, Cout)
        shift = (cb * scale + beta - mean * scale)[None, :]             # (1, Cout)
        return taps[0], taps[1], taps[2], shift

    out = []
    out += conv(p["w1"], p["cb1"], p["bn1"])
    out += conv(p["w2"], p["cb2"], p["bn2"])
    out += conv(p["w3"], p["cb3"], p["bn3"])
    # fc1: PyTorch flattens (B, C=128, L=3) channel-major (flat = c*3 + l); the kernel
    # accumulates per pooled position l, so split wf1 into three (128, 64) slabs.
    wf1_l = jnp.transpose(p["wf1"].reshape(64, 128, 3), (2, 1, 0))      # (3, 128, 64)
    out += [wf1_l[0], wf1_l[1], wf1_l[2], p["bf1"][None, :]]
    out += [p["wf2"].T, p["bf2"][None, :]]                              # (64, F), (1, F)
    return tuple(out)


def ref_forward(x, p):
    z = jnp.transpose(x, (0, 2, 1))                                     # (B, C, L) like PyTorch

    def conv1d(z, w, b):
        B, C, L = z.shape
        zp = jnp.pad(z, ((0, 0), (0, 0), (1, 1)))
        out = sum(jnp.einsum("oc,bcl->bol", w[:, :, k], zp[:, :, k:k + L])
                  for k in range(3))
        return out + b[None, :, None]

    def bn(z, bnp):
        gamma, beta, mean, var = bnp
        return ((z - mean[None, :, None]) / jnp.sqrt(var + BN_EPS)[None, :, None]
                * gamma[None, :, None] + beta[None, :, None])

    def pool(z):
        B, C, L = z.shape
        return z.reshape(B, C, L // 2, 2).max(axis=-1)

    z = pool(jnp.maximum(bn(conv1d(z, p["w1"], p["cb1"]), p["bn1"]), 0.0))
    z = pool(jnp.maximum(bn(conv1d(z, p["w2"], p["cb2"]), p["bn2"]), 0.0))
    z = pool(jnp.maximum(bn(conv1d(z, p["w3"], p["cb3"]), p["bn3"]), 0.0))
    flat = z.reshape(z.shape[0], -1)                                    # (B, 384) channel-major
    h = jnp.maximum(flat @ p["wf1"].T + p["bf1"], 0.0)
    o = jax.nn.sigmoid(h @ p["wf2"].T + p["bf2"])                       # (B, F)
    return jnp.broadcast_to(o[:, None, :], (o.shape[0], SEQ, NUM_FEATURES))


if __name__ == "__main__":
    key = jax.random.PRNGKey(0)
    kx, kp = jax.random.split(key)
    x = jax.random.normal(kx, (BATCH, SEQ, NUM_FEATURES), jnp.float32)

    pt_params = make_pt_params(kp)
    kparams = to_kernel_params(pt_params)

    out = netdisc_forward(x, kparams)
    out = jax.block_until_ready(out)

    ref = ref_forward(x, pt_params)
    assert out.shape == (BATCH, SEQ, NUM_FEATURES)
    err = jnp.max(jnp.abs(out - ref))
    assert jnp.allclose(out, ref, rtol=1e-3, atol=1e-4), f"max abs err {err}"
    print("KERNEL_OK")
</pallas_src>

<mosaic_0001>
module attributes {stable_mosaic.version = 11 : i64} {
  func.func @netdisc_kernel(%arg0: i32, %arg1: memref<24x8x4xf32, #tpu.memory_space<vmem>>, %arg2: memref<4x32xf32, #tpu.memory_space<vmem>>, %arg3: memref<4x32xf32, #tpu.memory_space<vmem>>, %arg4: memref<4x32xf32, #tpu.memory_space<vmem>>, %arg5: memref<1x32xf32, #tpu.memory_space<vmem>>, %arg6: memref<32x64xf32, #tpu.memory_space<vmem>>, %arg7: memref<32x64xf32, #tpu.memory_space<vmem>>, %arg8: memref<32x64xf32, #tpu.memory_space<vmem>>, %arg9: memref<1x64xf32, #tpu.memory_space<vmem>>, %arg10: memref<64x128xf32, #tpu.memory_space<vmem>>, %arg11: memref<64x128xf32, #tpu.memory_space<vmem>>, %arg12: memref<64x128xf32, #tpu.memory_space<vmem>>, %arg13: memref<1x128xf32, #tpu.memory_space<vmem>>, %arg14: memref<128x64xf32, #tpu.memory_space<vmem>>, %arg15: memref<128x64xf32, #tpu.memory_space<vmem>>, %arg16: memref<128x64xf32, #tpu.memory_space<vmem>>, %arg17: memref<1x64xf32, #tpu.memory_space<vmem>>, %arg18: memref<64x4xf32, #tpu.memory_space<vmem>>, %arg19: memref<1x4xf32, #tpu.memory_space<vmem>>, %arg20: memref<8x4xf32, #tpu.memory_space<vmem>>) attributes {dimension_semantics = [#tpu.dimension_semantics<parallel>], iteration_bounds = array<i64: 1>, scalar_prefetch = 0 : i64, scratch_operands = 0 : i64, tpu.core_type = #tpu.core_type<tc>, window_params = [{transform_indices = @transform_0, window_bounds = array<i64: 24, 8, 4>}, {pipeline_mode = #tpu.pipeline_mode<synchronous>, transform_indices = @transform_1, window_bounds = array<i64: 4, 32>}, {pipeline_mode = #tpu.pipeline_mode<synchronous>, transform_indices = @transform_2, window_bounds = array<i64: 4, 32>}, {pipeline_mode = #tpu.pipeline_mode<synchronous>, transform_indices = @transform_3, window_bounds = array<i64: 4, 32>}, {pipeline_mode = #tpu.pipeline_mode<synchronous>, transform_indices = @transform_4, window_bounds = array<i64: 1, 32>}, {pipeline_mode = #tpu.pipeline_mode<synchronous>, transform_indices = @transform_5, window_bounds = array<i64: 32, 64>}, {pipeline_mode = #tpu.pipeline_mode<synchronous>, transform_indices = @transform_6, window_bounds = array<i64: 32, 64>}, {pipeline_mode = #tpu.pipeline_mode<synchronous>, transform_indices = @transform_7, window_bounds = array<i64: 32, 64>}, {pipeline_mode = #tpu.pipeline_mode<synchronous>, transform_indices = @transform_8, window_bounds = array<i64: 1, 64>}, {pipeline_mode = #tpu.pipeline_mode<synchronous>, transform_indices = @transform_9, window_bounds = array<i64: 64, 128>}, {pipeline_mode = #tpu.pipeline_mode<synchronous>, transform_indices = @transform_10, window_bounds = array<i64: 64, 128>}, {pipeline_mode = #tpu.pipeline_mode<synchronous>, transform_indices = @transform_11, window_bounds = array<i64: 64, 128>}, {pipeline_mode = #tpu.pipeline_mode<synchronous>, transform_indices = @transform_12, window_bounds = array<i64: 1, 128>}, {pipeline_mode = #tpu.pipeline_mode<synchronous>, transform_indices = @transform_13, window_bounds = array<i64: 128, 64>}, {pipeline_mode = #tpu.pipeline_mode<synchronous>, transform_indices = @transform_14, window_bounds = array<i64: 128, 64>}, {pipeline_mode = #tpu.pipeline_mode<synchronous>, transform_indices = @transform_15, window_bounds = array<i64: 128, 64>}, {pipeline_mode = #tpu.pipeline_mode<synchronous>, transform_indices = @transform_16, window_bounds = array<i64: 1, 64>}, {pipeline_mode = #tpu.pipeline_mode<synchronous>, transform_indices = @transform_17, window_bounds = array<i64: 64, 4>}, {pipeline_mode = #tpu.pipeline_mode<synchronous>, transform_indices = @transform_18, window_bounds = array<i64: 1, 4>}, {transform_indices = @transform_19, window_bounds = array<i64: 8, 4>}]} {
    %c0 = arith.constant 0 : index
    %c0_0 = arith.constant 0 : index
    %c0_1 = arith.constant 0 : index
    %0 = vector.load %arg1[%c0, %c0_0, %c0_1] : memref<24x8x4xf32, #tpu.memory_space<vmem>>, vector<24x8x4xf32>
    %cst = arith.constant 0.000000e+00 : f32
    %1 = vector.broadcast %cst : f32 to vector<1x8x4xf32>
    %2 = vector.extract_strided_slice %0 {offsets = [0, 0, 0], sizes = [23, 8, 4], strides = [1, 1, 1]} : vector<24x8x4xf32> to vector<23x8x4xf32>
    %3 = tpu.concatenate %1, %2 in 0 : vector<1x8x4xf32>, vector<23x8x4xf32> -> vector<24x8x4xf32>
    %4 = vector.extract_strided_slice %0 {offsets = [1, 0, 0], sizes = [23, 8, 4], strides = [1, 1, 1]} : vector<24x8x4xf32> to vector<23x8x4xf32>
    %5 = tpu.concatenate %4, %1 in 0 : vector<23x8x4xf32>, vector<1x8x4xf32> -> vector<24x8x4xf32>
    %6 = vector.shape_cast %3 : vector<24x8x4xf32> to vector<192x4xf32>
    %c0_2 = arith.constant 0 : index
    %c0_3 = arith.constant 0 : index
    %7 = vector.load %arg2[%c0_2, %c0_3] : memref<4x32xf32, #tpu.memory_space<vmem>>, vector<4x32xf32>
    %cst_4 = arith.constant dense<0.000000e+00> : vector<192x32xf32>
    %8 = tpu.matmul %6, %7, %cst_4 {dimension_numbers = #tpu.dot_dimension_numbers<[1], [0], [0], [1], [0, 0, 1, 1], [], []>} : vector<192x4xf32>, vector<4x32xf32>, vector<192x32xf32> -> vector<192x32xf32>
    %9 = vector.shape_cast %0 : vector<24x8x4xf32> to vector<192x4xf32>
    %c0_5 = arith.constant 0 : index
    %c0_6 = arith.constant 0 : index
    %10 = vector.load %arg3[%c0_5, %c0_6] : memref<4x32xf32, #tpu.memory_space<vmem>>, vector<4x32xf32>
    %cst_7 = arith.constant dense<0.000000e+00> : vector<192x32xf32>
    %11 = tpu.matmul %9, %10, %cst_7 {dimension_numbers = #tpu.dot_dimension_numbers<[1], [0], [0], [1], [0, 0, 1, 1], [], []>} : vector<192x4xf32>, vector<4x32xf32>, vector<192x32xf32> -> vector<192x32xf32>
    %12 = arith.addf %8, %11 : vector<192x32xf32>
    %13 = vector.shape_cast %5 : vector<24x8x4xf32> to vector<192x4xf32>
    %c0_8 = arith.constant 0 : index
    %c0_9 = arith.constant 0 : index
    %14 = vector.load %arg4[%c0_8, %c0_9] : memref<4x32xf32, #tpu.memory_space<vmem>>, vector<4x32xf32>
    %cst_10 = arith.constant dense<0.000000e+00> : vector<192x32xf32>
    %15 = tpu.matmul %13, %14, %cst_10 {dimension_numbers = #tpu.dot_dimension_numbers<[1], [0], [0], [1], [0, 0, 1, 1], [], []>} : vector<192x4xf32>, vector<4x32xf32>, vector<192x32xf32> -> vector<192x32xf32>
    %16 = arith.addf %12, %15 : vector<192x32xf32>
    %c0_11 = arith.constant 0 : index
    %c0_12 = arith.constant 0 : index
    %17 = vector.load %arg5[%c0_11, %c0_12] : memref<1x32xf32, #tpu.memory_space<vmem>>, vector<1x32xf32>
    %18 = vector.broadcast %17 : vector<1x32xf32> to vector<192x32xf32>
    %19 = arith.addf %16, %18 : vector<192x32xf32>
    %cst_13 = arith.constant 0.000000e+00 : f32
    %20 = vector.broadcast %cst_13 : f32 to vector<192x32xf32>
    %21 = arith.maximumf %19, %20 : vector<192x32xf32>
    %22 = vector.shape_cast %21 : vector<192x32xf32> to vector<24x8x32xf32>
    %23 = vector.shape_cast %22 : vector<24x8x32xf32> to vector<12x2x8x32xf32>
    %24 = vector.extract_strided_slice %23 {offsets = [0, 0, 0, 0], sizes = [12, 1, 8, 32], strides = [1, 1, 1, 1]} : vector<12x2x8x32xf32> to vector<12x1x8x32xf32>
    %25 = vector.shape_cast %24 : vector<12x1x8x32xf32> to vector<12x8x32xf32>
    %26 = vector.extract_strided_slice %23 {offsets = [0, 1, 0, 0], sizes = [12, 1, 8, 32], strides = [1, 1, 1, 1]} : vector<12x2x8x32xf32> to vector<12x1x8x32xf32>
    %27 = vector.shape_cast %26 : vector<12x1x8x32xf32> to vector<12x8x32xf32>
    %28 = arith.maximumf %25, %27 : vector<12x8x32xf32>
    %cst_14 = arith.constant 0.000000e+00 : f32
    %29 = vector.broadcast %cst_14 : f32 to vector<1x8x32xf32>
    %30 = vector.extract_strided_slice %28 {offsets = [0, 0, 0], sizes = [11, 8, 32], strides = [1, 1, 1]} : vector<12x8x32xf32> to vector<11x8x32xf32>
    %31 = tpu.concatenate %29, %30 in 0 : vector<1x8x32xf32>, vector<11x8x32xf32> -> vector<12x8x32xf32>
    %32 = vector.extract_strided_slice %28 {offsets = [1, 0, 0], sizes = [11, 8, 32], strides = [1, 1, 1]} : vector<12x8x32xf32> to vector<11x8x32xf32>
    %33 = tpu.concatenate %32, %29 in 0 : vector<11x8x32xf32>, vector<1x8x32xf32> -> vector<12x8x32xf32>
    %34 = vector.shape_cast %31 : vector<12x8x32xf32> to vector<96x32xf32>
    %c0_15 = arith.constant 0 : index
    %c0_16 = arith.constant 0 : index
    %35 = vector.load %arg6[%c0_15, %c0_16] : memref<32x64xf32, #tpu.memory_space<vmem>>, vector<32x64xf32>
    %cst_17 = arith.constant dense<0.000000e+00> : vector<96x64xf32>
    %36 = tpu.matmul %34, %35, %cst_17 {dimension_numbers = #tpu.dot_dimension_numbers<[1], [0], [0], [1], [0, 0, 1, 1], [], []>} : vector<96x32xf32>, vector<32x64xf32>, vector<96x64xf32> -> vector<96x64xf32>
    %37 = vector.shape_cast %28 : vector<12x8x32xf32> to vector<96x32xf32>
    %c0_18 = arith.constant 0 : index
    %c0_19 = arith.constant 0 : index
    %38 = vector.load %arg7[%c0_18, %c0_19] : memref<32x64xf32, #tpu.memory_space<vmem>>, vector<32x64xf32>
    %cst_20 = arith.constant dense<0.000000e+00> : vector<96x64xf32>
    %39 = tpu.matmul %37, %38, %cst_20 {dimension_numbers = #tpu.dot_dimension_numbers<[1], [0], [0], [1], [0, 0, 1, 1], [], []>} : vector<96x32xf32>, vector<32x64xf32>, vector<96x64xf32> -> vector<96x64xf32>
    %40 = arith.addf %36, %39 : vector<96x64xf32>
    %41 = vector.shape_cast %33 : vector<12x8x32xf32> to vector<96x32xf32>
    %c0_21 = arith.constant 0 : index
    %c0_22 = arith.constant 0 : index
    %42 = vector.load %arg8[%c0_21, %c0_22] : memref<32x64xf32, #tpu.memory_space<vmem>>, vector<32x64xf32>
    %cst_23 = arith.constant dense<0.000000e+00> : vector<96x64xf32>
    %43 = tpu.matmul %41, %42, %cst_23 {dimension_numbers = #tpu.dot_dimension_numbers<[1], [0], [0], [1], [0, 0, 1, 1], [], []>} : vector<96x32xf32>, vector<32x64xf32>, vector<96x64xf32> -> vector<96x64xf32>
    %44 = arith.addf %40, %43 : vector<96x64xf32>
    %c0_24 = arith.constant 0 : index
    %c0_25 = arith.constant 0 : index
    %45 = vector.load %arg9[%c0_24, %c0_25] : memref<1x64xf32, #tpu.memory_space<vmem>>, vector<1x64xf32>
    %46 = vector.broadcast %45 : vector<1x64xf32> to vector<96x64xf32>
    %47 = arith.addf %44, %46 : vector<96x64xf32>
    %cst_26 = arith.constant 0.000000e+00 : f32
    %48 = vector.broadcast %cst_26 : f32 to vector<96x64xf32>
    %49 = arith.maximumf %47, %48 : vector<96x64xf32>
    %50 = vector.shape_cast %49 : vector<96x64xf32> to vector<12x8x64xf32>
    %51 = vector.shape_cast %50 : vector<12x8x64xf32> to vector<6x2x8x64xf32>
    %52 = vector.extract_strided_slice %51 {offsets = [0, 0, 0, 0], sizes = [6, 1, 8, 64], strides = [1, 1, 1, 1]} : vector<6x2x8x64xf32> to vector<6x1x8x64xf32>
    %53 = vector.shape_cast %52 : vector<6x1x8x64xf32> to vector<6x8x64xf32>
    %54 = vector.extract_strided_slice %51 {offsets = [0, 1, 0, 0], sizes = [6, 1, 8, 64], strides = [1, 1, 1, 1]} : vector<6x2x8x64xf32> to vector<6x1x8x64xf32>
    %55 = vector.shape_cast %54 : vector<6x1x8x64xf32> to vector<6x8x64xf32>
    %56 = arith.maximumf %53, %55 : vector<6x8x64xf32>
    %cst_27 = arith.constant 0.000000e+00 : f32
    %57 = vector.broadcast %cst_27 : f32 to vector<1x8x64xf32>
    %58 = vector.extract_strided_slice %56 {offsets = [0, 0, 0], sizes = [5, 8, 64], strides = [1, 1, 1]} : vector<6x8x64xf32> to vector<5x8x64xf32>
    %59 = tpu.concatenate %57, %58 in 0 : vector<1x8x64xf32>, vector<5x8x64xf32> -> vector<6x8x64xf32>
    %60 = vector.extract_strided_slice %56 {offsets = [1, 0, 0], sizes = [5, 8, 64], strides = [1, 1, 1]} : vector<6x8x64xf32> to vector<5x8x64xf32>
    %61 = tpu.concatenate %60, %57 in 0 : vector<5x8x64xf32>, vector<1x8x64xf32> -> vector<6x8x64xf32>
    %62 = vector.shape_cast %59 : vector<6x8x64xf32> to vector<48x64xf32>
    %c0_28 = arith.constant 0 : index
    %c0_29 = arith.constant 0 : index
    %63 = vector.load %arg10[%c0_28, %c0_29] : memref<64x128xf32, #tpu.memory_space<vmem>>, vector<64x128xf32>
    %cst_30 = arith.constant dense<0.000000e+00> : vector<48x128xf32>
    %64 = tpu.matmul %62, %63, %cst_30 {dimension_numbers = #tpu.dot_dimension_numbers<[1], [0], [0], [1], [0, 0, 1, 1], [], []>} : vector<48x64xf32>, vector<64x128xf32>, vector<48x128xf32> -> vector<48x128xf32>
    %65 = vector.shape_cast %56 : vector<6x8x64xf32> to vector<48x64xf32>
    %c0_31 = arith.constant 0 : index
    %c0_32 = arith.constant 0 : index
    %66 = vector.load %arg11[%c0_31, %c0_32] : memref<64x128xf32, #tpu.memory_space<vmem>>, vector<64x128xf32>
    %cst_33 = arith.constant dense<0.000000e+00> : vector<48x128xf32>
    %67 = tpu.matmul %65, %66, %cst_33 {dimension_numbers = #tpu.dot_dimension_numbers<[1], [0], [0], [1], [0, 0, 1, 1], [], []>} : vector<48x64xf32>, vector<64x128xf32>, vector<48x128xf32> -> vector<48x128xf32>
    %68 = arith.addf %64, %67 : vector<48x128xf32>
    %69 = vector.shape_cast %61 : vector<6x8x64xf32> to vector<48x64xf32>
    %c0_34 = arith.constant 0 : index
    %c0_35 = arith.constant 0 : index
    %70 = vector.load %arg12[%c0_34, %c0_35] : memref<64x128xf32, #tpu.memory_space<vmem>>, vector<64x128xf32>
    %cst_36 = arith.constant dense<0.000000e+00> : vector<48x128xf32>
    %71 = tpu.matmul %69, %70, %cst_36 {dimension_numbers = #tpu.dot_dimension_numbers<[1], [0], [0], [1], [0, 0, 1, 1], [], []>} : vector<48x64xf32>, vector<64x128xf32>, vector<48x128xf32> -> vector<48x128xf32>
    %72 = arith.addf %68, %71 : vector<48x128xf32>
    %c0_37 = arith.constant 0 : index
    %c0_38 = arith.constant 0 : index
    %73 = vector.load %arg13[%c0_37, %c0_38] : memref<1x128xf32, #tpu.memory_space<vmem>>, vector<1x128xf32>
    %74 = vector.broadcast %73 : vector<1x128xf32> to vector<48x128xf32>
    %75 = arith.addf %72, %74 : vector<48x128xf32>
    %cst_39 = arith.constant 0.000000e+00 : f32
    %76 = vector.broadcast %cst_39 : f32 to vector<48x128xf32>
    %77 = arith.maximumf %75, %76 : vector<48x128xf32>
    %78 = vector.shape_cast %77 : vector<48x128xf32> to vector<6x8x128xf32>
    %79 = vector.shape_cast %78 : vector<6x8x128xf32> to vector<3x2x8x128xf32>
    %80 = vector.extract_strided_slice %79 {offsets = [0, 0, 0, 0], sizes = [3, 1, 8, 128], strides = [1, 1, 1, 1]} : vector<3x2x8x128xf32> to vector<3x1x8x128xf32>
    %81 = vector.shape_cast %80 : vector<3x1x8x128xf32> to vector<3x8x128xf32>
    %82 = vector.extract_strided_slice %79 {offsets = [0, 1, 0, 0], sizes = [3, 1, 8, 128], strides = [1, 1, 1, 1]} : vector<3x2x8x128xf32> to vector<3x1x8x128xf32>
    %83 = vector.shape_cast %82 : vector<3x1x8x128xf32> to vector<3x8x128xf32>
    %84 = arith.maximumf %81, %83 : vector<3x8x128xf32>
    %85 = vector.extract_strided_slice %84 {offsets = [0, 0, 0], sizes = [1, 8, 128], strides = [1, 1, 1]} : vector<3x8x128xf32> to vector<1x8x128xf32>
    %86 = vector.shape_cast %85 : vector<1x8x128xf32> to vector<8x128xf32>
    %c0_40 = arith.constant 0 : index
    %c0_41 = arith.constant 0 : index
    %87 = vector.load %arg14[%c0_40, %c0_41] : memref<128x64xf32, #tpu.memory_space<vmem>>, vector<128x64xf32>
    %cst_42 = arith.constant dense<0.000000e+00> : vector<8x64xf32>
    %88 = tpu.matmul %86, %87, %cst_42 {dimension_numbers = #tpu.dot_dimension_numbers<[1], [0], [0], [1], [0, 0, 1, 1], [], []>} : vector<8x128xf32>, vector<128x64xf32>, vector<8x64xf32> -> vector<8x64xf32>
    %89 = vector.extract_strided_slice %84 {offsets = [1, 0, 0], sizes = [1, 8, 128], strides = [1, 1, 1]} : vector<3x8x128xf32> to vector<1x8x128xf32>
    %90 = vector.shape_cast %89 : vector<1x8x128xf32> to vector<8x128xf32>
    %c0_43 = arith.constant 0 : index
    %c0_44 = arith.constant 0 : index
    %91 = vector.load %arg15[%c0_43, %c0_44] : memref<128x64xf32, #tpu.memory_space<vmem>>, vector<128x64xf32>
    %cst_45 = arith.constant dense<0.000000e+00> : vector<8x64xf32>
    %92 = tpu.matmul %90, %91, %cst_45 {dimension_numbers = #tpu.dot_dimension_numbers<[1], [0], [0], [1], [0, 0, 1, 1], [], []>} : vector<8x128xf32>, vector<128x64xf32>, vector<8x64xf32> -> vector<8x64xf32>
    %93 = arith.addf %88, %92 : vector<8x64xf32>
    %94 = vector.extract_strided_slice %84 {offsets = [2, 0, 0], sizes = [1, 8, 128], strides = [1, 1, 1]} : vector<3x8x128xf32> to vector<1x8x128xf32>
    %95 = vector.shape_cast %94 : vector<1x8x128xf32> to vector<8x128xf32>
    %c0_46 = arith.constant 0 : index
    %c0_47 = arith.constant 0 : index
    %96 = vector.load %arg16[%c0_46, %c0_47] : memref<128x64xf32, #tpu.memory_space<vmem>>, vector<128x64xf32>
    %cst_48 = arith.constant dense<0.000000e+00> : vector<8x64xf32>
    %97 = tpu.matmul %95, %96, %cst_48 {dimension_numbers = #tpu.dot_dimension_numbers<[1], [0], [0], [1], [0, 0, 1, 1], [], []>} : vector<8x128xf32>, vector<128x64xf32>, vector<8x64xf32> -> vector<8x64xf32>
    %98 = arith.addf %93, %97 : vector<8x64xf32>
    %c0_49 = arith.constant 0 : index
    %c0_50 = arith.constant 0 : index
    %99 = vector.load %arg17[%c0_49, %c0_50] : memref<1x64xf32, #tpu.memory_space<vmem>>, vector<1x64xf32>
    %100 = vector.broadcast %99 : vector<1x64xf32> to vector<8x64xf32>
    %101 = arith.addf %98, %100 : vector<8x64xf32>
    %cst_51 = arith.constant 0.000000e+00 : f32
    %102 = vector.broadcast %cst_51 : f32 to vector<8x64xf32>
    %103 = arith.maximumf %101, %102 : vector<8x64xf32>
    %c0_52 = arith.constant 0 : index
    %c0_53 = arith.constant 0 : index
    %104 = vector.load %arg18[%c0_52, %c0_53] : memref<64x4xf32, #tpu.memory_space<vmem>>, vector<64x4xf32>
    %cst_54 = arith.constant dense<0.000000e+00> : vector<8x4xf32>
    %105 = tpu.matmul %103, %104, %cst_54 {dimension_numbers = #tpu.dot_dimension_numbers<[1], [0], [0], [1], [0, 0, 1, 1], [], []>} : vector<8x64xf32>, vector<64x4xf32>, vector<8x4xf32> -> vector<8x4xf32>
    %c0_55 = arith.constant 0 : index
    %c0_56 = arith.constant 0 : index
    %106 = vector.load %arg19[%c0_55, %c0_56] : memref<1x4xf32, #tpu.memory_space<vmem>>, vector<1x4xf32>
    %107 = vector.broadcast %106 : vector<1x4xf32> to vector<8x4xf32>
    %108 = arith.addf %105, %107 : vector<8x4xf32>
    %109 = arith.negf %108 : vector<8x4xf32>
    %110 = math.exp %109 : vector<8x4xf32>
    %cst_57 = arith.constant 1.000000e+00 : f32
    %111 = vector.broadcast %cst_57 : f32 to vector<8x4xf32>
    %112 = arith.addf %111, %110 : vector<8x4xf32>
    %113 = arith.divf %111, %112 : vector<8x4xf32>
    %c0_58 = arith.constant 0 : index
    %c0_59 = arith.constant 0 : index
    %114 = vector.load %arg20[%c0_58, %c0_59] : memref<8x4xf32, #tpu.memory_space<vmem>>, vector<8x4xf32>
    tpu.vector_store %arg20[%c0_58, %c0_59], %113 {strides = array<i32>} : memref<8x4xf32, #tpu.memory_space<vmem>>, vector<8x4xf32>,
    return
  }
  func.func @transform_0(%arg0: i32) -> (i32, i32, i32) {
    %c0_i32 = arith.constant 0 : i32
    %c0_i32_0 = arith.constant 0 : i32
    %c0_i32_1 = arith.constant 0 : i32
    return %c0_i32, %arg0, %c0_i32_0 : i32, i32, i32
  }
  func.func @transform_1(%arg0: i32) -> (i32, i32) {
    %c0_i32 = arith.constant 0 : i32
    %c0_i32_0 = arith.constant 0 : i32
    %c0_i32_1 = arith.constant 0 : i32
    return %c0_i32, %c0_i32_0 : i32, i32
  }
  func.func @transform_2(%arg0: i32) -> (i32, i32) {
    %c0_i32 = arith.constant 0 : i32
    %c0_i32_0 = arith.constant 0 : i32
    %c0_i32_1 = arith.constant 0 : i32
    return %c0_i32, %c0_i32_0 : i32, i32
  }
  func.func @transform_3(%arg0: i32) -> (i32, i32) {
    %c0_i32 = arith.constant 0 : i32
    %c0_i32_0 = arith.constant 0 : i32
    %c0_i32_1 = arith.constant 0 : i32
    return %c0_i32, %c0_i32_0 : i32, i32
  }
  func.func @transform_4(%arg0: i32) -> (i32, i32) {
    %c0_i32 = arith.constant 0 : i32
    %c0_i32_0 = arith.constant 0 : i32
    %c0_i32_1 = arith.constant 0 : i32
    return %c0_i32, %c0_i32_0 : i32, i32
  }
  func.func @transform_5(%arg0: i32) -> (i32, i32) {
    %c0_i32 = arith.constant 0 : i32
    %c0_i32_0 = arith.constant 0 : i32
    %c0_i32_1 = arith.constant 0 : i32
    return %c0_i32, %c0_i32_0 : i32, i32
  }
  func.func @transform_6(%arg0: i32) -> (i32, i32) {
    %c0_i32 = arith.constant 0 : i32
    %c0_i32_0 = arith.constant 0 : i32
    %c0_i32_1 = arith.constant 0 : i32
    return %c0_i32, %c0_i32_0 : i32, i32
  }
  func.func @transform_7(%arg0: i32) -> (i32, i32) {
    %c0_i32 = arith.constant 0 : i32
    %c0_i32_0 = arith.constant 0 : i32
    %c0_i32_1 = arith.constant 0 : i32
    return %c0_i32, %c0_i32_0 : i32, i32
  }
  func.func @transform_8(%arg0: i32) -> (i32, i32) {
    %c0_i32 = arith.constant 0 : i32
    %c0_i32_0 = arith.constant 0 : i32
    %c0_i32_1 = arith.constant 0 : i32
    return %c0_i32, %c0_i32_0 : i32, i32
  }
  func.func @transform_9(%arg0: i32) -> (i32, i32) {
    %c0_i32 = arith.constant 0 : i32
    %c0_i32_0 = arith.constant 0 : i32
    %c0_i32_1 = arith.constant 0 : i32
    return %c0_i32, %c0_i32_0 : i32, i32
  }
  func.func @transform_10(%arg0: i32) -> (i32, i32) {
    %c0_i32 = arith.constant 0 : i32
    %c0_i32_0 = arith.constant 0 : i32
    %c0_i32_1 = arith.constant 0 : i32
    return %c0_i32, %c0_i32_0 : i32, i32
  }
  func.func @transform_11(%arg0: i32) -> (i32, i32) {
    %c0_i32 = arith.constant 0 : i32
    %c0_i32_0 = arith.constant 0 : i32
    %c0_i32_1 = arith.constant 0 : i32
    return %c0_i32, %c0_i32_0 : i32, i32
  }
  func.func @transform_12(%arg0: i32) -> (i32, i32) {
    %c0_i32 = arith.constant 0 : i32
    %c0_i32_0 = arith.constant 0 : i32
    %c0_i32_1 = arith.constant 0 : i32
    return %c0_i32, %c0_i32_0 : i32, i32
  }
  func.func @transform_13(%arg0: i32) -> (i32, i32) {
    %c0_i32 = arith.constant 0 : i32
    %c0_i32_0 = arith.constant 0 : i32
    %c0_i32_1 = arith.constant 0 : i32
    return %c0_i32, %c0_i32_0 : i32, i32
  }
  func.func @transform_14(%arg0: i32) -> (i32, i32) {
    %c0_i32 = arith.constant 0 : i32
    %c0_i32_0 = arith.constant 0 : i32
    %c0_i32_1 = arith.constant 0 : i32
    return %c0_i32, %c0_i32_0 : i32, i32
  }
  func.func @transform_15(%arg0: i32) -> (i32, i32) {
    %c0_i32 = arith.constant 0 : i32
    %c0_i32_0 = arith.constant 0 : i32
    %c0_i32_1 = arith.constant 0 : i32
    return %c0_i32, %c0_i32_0 : i32, i32
  }
  func.func @transform_16(%arg0: i32) -> (i32, i32) {
    %c0_i32 = arith.constant 0 : i32
    %c0_i32_0 = arith.constant 0 : i32
    %c0_i32_1 = arith.constant 0 : i32
    return %c0_i32, %c0_i32_0 : i32, i32
  }
  func.func @transform_17(%arg0: i32) -> (i32, i32) {
    %c0_i32 = arith.constant 0 : i32
    %c0_i32_0 = arith.constant 0 : i32
    %c0_i32_1 = arith.constant 0 : i32
    return %c0_i32, %c0_i32_0 : i32, i32
  }
  func.func @transform_18(%arg0: i32) -> (i32, i32) {
    %c0_i32 = arith.constant 0 : i32
    %c0_i32_0 = arith.constant 0 : i32
    %c0_i32_1 = arith.constant 0 : i32
    return %c0_i32, %c0_i32_0 : i32, i32
  }
  func.func @transform_19(%arg0: i32) -> (i32, i32) {
    %c0_i32 = arith.constant 0 : i32
    %c0_i32_0 = arith.constant 0 : i32
    return %arg0, %c0_i32 : i32, i32
  }
}

</mosaic_0001>

<llo_original>
// kernel: tpu_custom_call.1
$region0: #{tpu_custom_call.1}
  #allocation0 [shape = 'u32[]', space=smem, size = 0x4, offset = 0x4, fixed_abs, tag = 'smem constant byte address 0x4 - core index']
  #allocation1 [shape = 'u32[144,128]{1,0:T(1,128)}', space=vmem, size = 0x12000, scoped, tag = 'internal scratch']
  %s0 = inlined_call_operand.vmem [shape: f32[24,8,4], index: 0, kind: input, shape index: {}]
  %s1 = inlined_call_operand.vmem [shape: f32[4,32], index: 1, kind: input, shape index: {}]
  %s2 = inlined_call_operand.vmem [shape: f32[4,32], index: 2, kind: input, shape index: {}]
  %s3 = inlined_call_operand.vmem [shape: f32[4,32], index: 3, kind: input, shape index: {}]
  %s4 = inlined_call_operand.vmem [shape: f32[1,32], index: 4, kind: input, shape index: {}]
  %s5 = inlined_call_operand.vmem [shape: f32[32,64], index: 5, kind: input, shape index: {}]
  %s6 = inlined_call_operand.vmem [shape: f32[32,64], index: 6, kind: input, shape index: {}]
  %s7 = inlined_call_operand.vmem [shape: f32[32,64], index: 7, kind: input, shape index: {}]
  %s8 = inlined_call_operand.vmem [shape: f32[1,64], index: 8, kind: input, shape index: {}]
  %s9 = inlined_call_operand.vmem [shape: f32[64,128], index: 9, kind: input, shape index: {}]
  %s10 = inlined_call_operand.vmem [shape: f32[64,128], index: 10, kind: input, shape index: {}]
  %s11 = inlined_call_operand.vmem [shape: f32[64,128], index: 11, kind: input, shape index: {}]
  %s12 = inlined_call_operand.vmem [shape: f32[1,128], index: 12, kind: input, shape index: {}]
  %s13 = inlined_call_operand.vmem [shape: f32[128,64], index: 13, kind: input, shape index: {}]
  %s14 = inlined_call_operand.vmem [shape: f32[128,64], index: 14, kind: input, shape index: {}]
  %s15 = inlined_call_operand.vmem [shape: f32[128,64], index: 15, kind: input, shape index: {}]
  %s16 = inlined_call_operand.vmem [shape: f32[1,64], index: 16, kind: input, shape index: {}]
  %s17 = inlined_call_operand.vmem [shape: f32[64,4], index: 17, kind: input, shape index: {}]
  %s18 = inlined_call_operand.vmem [shape: f32[1,4], index: 18, kind: input, shape index: {}]
  %s19 = inlined_call_operand.vmem [shape: f32[8,4], index: 19, kind: output, shape index: {}]
  %s20 = sld [smem:[#allocation0]]
  $region86: #{tpu_custom_call.1} parent=0
    _
  %s22 = ssub.s32 1, %s20
  %s23 = scalar_select 0, %s22, %s20
  // Predicated region
  $region2: #{tpu_custom_call.1} parent=0 // pred_check
    _
  $region3: #{tpu_custom_call.1} parent=0 // pred_check_branch
    %25 = sbr.rel (0) target = $region5
  $region4: #{tpu_custom_call.1} parent=0 // pred_region
    _
  $region5: #{tpu_custom_call.1} parent=0 // pred_fallthru
    _
  // Predicated region
  $region6: #{tpu_custom_call.1} parent=0 // pred_check
    _
  $region7: #{tpu_custom_call.1} parent=0 // pred_check_branch
    %27 = sbr.rel (0) target = $region9
  $region8: #{tpu_custom_call.1} parent=0 // pred_region
    _
  $region9: #{tpu_custom_call.1} parent=0 // pred_fallthru
    _
  // Predicated region
  $region10: #{tpu_custom_call.1} parent=0 // pred_check
    _
  $region11: #{tpu_custom_call.1} parent=0 // pred_check_branch
    %29 = sbr.rel (0) target = $region13
  $region12: #{tpu_custom_call.1} parent=0 // pred_region
    _
  $region13: #{tpu_custom_call.1} parent=0 // pred_fallthru
    _
  // Predicated region
  $region14: #{tpu_custom_call.1} parent=0 // pred_check
    _
  $region15: #{tpu_custom_call.1} parent=0 // pred_check_branch
    %31 = sbr.rel (0) target = $region17
  $region16: #{tpu_custom_call.1} parent=0 // pred_region
    _
  $region17: #{tpu_custom_call.1} parent=0 // pred_fallthru
    _
  // Predicated region
  $region18: #{tpu_custom_call.1} parent=0 // pred_check
    _
  $region19: #{tpu_custom_call.1} parent=0 // pred_check_branch
    %33 = sbr.rel (0) target = $region21
  $region20: #{tpu_custom_call.1} parent=0 // pred_region
    _
  $region21: #{tpu_custom_call.1} parent=0 // pred_fallthru
    _
  // Predicated region
  $region22: #{tpu_custom_call.1} parent=0 // pred_check
    _
  $region23: #{tpu_custom_call.1} parent=0 // pred_check_branch
    %35 = sbr.rel (0) target = $region25
  $region24: #{tpu_custom_call.1} parent=0 // pred_region
    _
  $region25: #{tpu_custom_call.1} parent=0 // pred_fallthru
    _
  // Predicated region
  $region26: #{tpu_custom_call.1} parent=0 // pred_check
    _
  $region27: #{tpu_custom_call.1} parent=0 // pred_check_branch
    %37 = sbr.rel (0) target = $region29
  $region28: #{tpu_custom_call.1} parent=0 // pred_region
    _
  $region29: #{tpu_custom_call.1} parent=0 // pred_fallthru
    _
  // Predicated region
  $region30: #{tpu_custom_call.1} parent=0 // pred_check
    _
  $region31: #{tpu_custom_call.1} parent=0 // pred_check_branch
    %39 = sbr.rel (0) target = $region33
  $region32: #{tpu_custom_call.1} parent=0 // pred_region
    _
  $region33: #{tpu_custom_call.1} parent=0 // pred_fallthru
    _
  // Predicated region
  $region34: #{tpu_custom_call.1} parent=0 // pred_check
    _
  $region35: #{tpu_custom_call.1} parent=0 // pred_check_branch
    %41 = sbr.rel (0) target = $region37
  $region36: #{tpu_custom_call.1} parent=0 // pred_region
    _
  $region37: #{tpu_custom_call.1} parent=0 // pred_fallthru
    _
  // Predicated region
  $region38: #{tpu_custom_call.1} parent=0 // pred_check
    _
  $region39: #{tpu_custom_call.1} parent=0 // pred_check_branch
    %43 = sbr.rel (0) target = $region41
  $region40: #{tpu_custom_call.1} parent=0 // pred_region
    _
  $region41: #{tpu_custom_call.1} parent=0 // pred_fallthru
    _
  // Predicated region
  $region42: #{tpu_custom_call.1} parent=0 // pred_check
    _
  $region43: #{tpu_custom_call.1} parent=0 // pred_check_branch
    %45 = sbr.rel (0) target = $region45
  $region44: #{tpu_custom_call.1} parent=0 // pred_region
    _
  $region45: #{tpu_custom_call.1} parent=0 // pred_fallthru
    _
  // Predicated region
  $region46: #{tpu_custom_call.1} parent=0 // pred_check
    _
  $region47: #{tpu_custom_call.1} parent=0 // pred_check_branch
    %47 = sbr.rel (0) target = $region49
  $region48: #{tpu_custom_call.1} parent=0 // pred_region
    _
  $region49: #{tpu_custom_call.1} parent=0 // pred_fallthru
    _
  // Predicated region
  $region50: #{tpu_custom_call.1} parent=0 // pred_check
    _
  $region51: #{tpu_custom_call.1} parent=0 // pred_check_branch
    %49 = sbr.rel (0) target = $region53
  $region52: #{tpu_custom_call.1} parent=0 // pred_region
    _
  $region53: #{tpu_custom_call.1} parent=0 // pred_fallthru
    _
  // Predicated region
  $region54: #{tpu_custom_call.1} parent=0 // pred_check
    _
  $region55: #{tpu_custom_call.1} parent=0 // pred_check_branch
    %51 = sbr.rel (0) target = $region57
  $region56: #{tpu_custom_call.1} parent=0 // pred_region
    _
  $region57: #{tpu_custom_call.1} parent=0 // pred_fallthru
    _
  // Predicated region
  $region58: #{tpu_custom_call.1} parent=0 // pred_check
    _
  $region59: #{tpu_custom_call.1} parent=0 // pred_check_branch
    %53 = sbr.rel (0) target = $region61
  $region60: #{tpu_custom_call.1} parent=0 // pred_region
    _
  $region61: #{tpu_custom_call.1} parent=0 // pred_fallthru
    _
  // Predicated region
  $region62: #{tpu_custom_call.1} parent=0 // pred_check
    _
  $region63: #{tpu_custom_call.1} parent=0 // pred_check_branch
    %55 = sbr.rel (0) target = $region65
  $region64: #{tpu_custom_call.1} parent=0 // pred_region
    _
  $region65: #{tpu_custom_call.1} parent=0 // pred_fallthru
    _
  // Predicated region
  $region66: #{tpu_custom_call.1} parent=0 // pred_check
    _
  $region67: #{tpu_custom_call.1} parent=0 // pred_check_branch
    %57 = sbr.rel (0) target = $region69
  $region68: #{tpu_custom_call.1} parent=0 // pred_region
    _
  $region69: #{tpu_custom_call.1} parent=0 // pred_fallthru
    _
  // Predicated region
  $region70: #{tpu_custom_call.1} parent=0 // pred_check
    _
  $region71: #{tpu_custom_call.1} parent=0 // pred_check_branch
    %59 = sbr.rel (0) target = $region73
  $region72: #{tpu_custom_call.1} parent=0 // pred_region
    _
  $region73: #{tpu_custom_call.1} parent=0 // pred_fallthru
    _
  // Predicated region
  $region74: #{tpu_custom_call.1} parent=0 // pred_check
    _
  $region75: #{tpu_custom_call.1} parent=0 // pred_check_branch
    %61 = sbr.rel (0) target = $region77
  $region76: #{tpu_custom_call.1} parent=0 // pred_region
    _
  $region77: #{tpu_custom_call.1} parent=0 // pred_fallthru
    _
  %v62 = vld [vmem:[%s0] sm:$0xff]
  %v63 = vld [vmem:[%s0 + $0x8] sm:$0xff]
  %v64 = vld [vmem:[%s0 + $0x10] sm:$0xff]
  %v65 = vld [vmem:[%s0 + $0x18] sm:$0xff]
  %v66 = vld [vmem:[%s0 + $0x20] sm:$0xff]
  %v67 = vld [vmem:[%s0 + $0x28] sm:$0xff]
  %v68 = vld [vmem:[%s0 + $0x30] sm:$0xff]
  %v69 = vld [vmem:[%s0 + $0x38] sm:$0xff]
  %v70 = vld [vmem:[%s0 + $0x40] sm:$0xff]
  %v71 = vld [vmem:[%s0 + $0x48] sm:$0xff]
  %v72 = vld [vmem:[%s0 + $0x50] sm:$0xff]
  %v73 = vld [vmem:[%s0 + $0x58] sm:$0xff]
  %v74 = vld [vmem:[%s0 + $0x60] sm:$0xff]
  %v75 = vld [vmem:[%s0 + $0x68] sm:$0xff]
  %v76 = vld [vmem:[%s0 + $0x70] sm:$0xff]
  %v77 = vld [vmem:[%s0 + $0x78] sm:$0xff]
  %v78 = vld [vmem:[%s0 + $0x80] sm:$0xff]
  %v79 = vld [vmem:[%s0 + $0x88] sm:$0xff]
  %v80 = vld [vmem:[%s0 + $0x90] sm:$0xff]
  %v81 = vld [vmem:[%s0 + $0x98] sm:$0xff]
  %v82 = vld [vmem:[%s0 + $0xa0] sm:$0xff]
  %v83 = vld [vmem:[%s0 + $0xa8] sm:$0xff]
  %v84 = vld [vmem:[%s0 + $0xb0] sm:$0xff]
  %v85 = vld [vmem:[%s0 + $0xb8] sm:$0xff]
  %v86 = vld [vmem:[%s1] sm:$0xf]
  %v87 = vld [vmem:[%s2] sm:$0xf]
  %vm88 = vcmask 31744
  %v90 = vsel %vm88, %v62, 0
  %v93 = vsel %vm88, %v63, 0
  %v96 = vsel %vm88, %v64, 0
  %v99 = vsel %vm88, %v65, 0
  %v102 = vsel %vm88, %v66, 0
  %v105 = vsel %vm88, %v67, 0
  %v108 = vsel %vm88, %v68, 0
  %v111 = vsel %vm88, %v69, 0
  %v114 = vsel %vm88, %v70, 0
  %v117 = vsel %vm88, %v71, 0
  %v120 = vsel %vm88, %v72, 0
  %v123 = vsel %vm88, %v73, 0
  %v126 = vsel %vm88, %v74, 0
  %v129 = vsel %vm88, %v75, 0
  %v132 = vsel %vm88, %v76, 0
  %v135 = vsel %vm88, %v77, 0
  %v138 = vsel %vm88, %v78, 0
  %v141 = vsel %vm88, %v79, 0
  %v144 = vsel %vm88, %v80, 0
  %v147 = vsel %vm88, %v81, 0
  %v150 = vsel %vm88, %v82, 0
  %v153 = vsel %vm88, %v83, 0
  %v156 = vsel %vm88, %v84, 0
  %v159 = vsel %vm88, %v85, 0
  %vm161 = vcmask 1043456
  %v163 = vsel %vm161, %v87, 0
  %165 = vmatprep.subr.mxu0 0.0
  %166 = vmatpush1.msra.mxu0 %v163
  %167 = vmatprep.subr.mxu0 0.0
  %168 = vmatpush1.msra.mxu0 0.0
  %169 = vmatprep.subr.mxu0 0.0
  %170 = vmatpush1.msra.mxu0 0.0
  %171 = vmatprep.subr.mxu0 0.0
  %172 = vmatpush1.msra.mxu0 0.0
  %173 = vmatprep.subr.mxu0 0.0
  %174 = vmatpush1.msra.mxu0 0.0
  %175 = vmatprep.subr.mxu0 0.0
  %176 = vmatpush1.msra.mxu0 0.0
  %177 = vmatprep.subr.mxu0 0.0
  %178 = vmatpush1.msra.mxu0 0.0
  %179 = vmatprep.subr.mxu0 0.0
  %180 = vmatpush1.msra.mxu0 0.0
  %181 = vmatprep.subr.mxu0 0.0
  %182 = vmatpush1.msra.mxu0 0.0
  %183 = vmatprep.subr.mxu0 0.0
  %184 = vmatpush1.msra.mxu0 0.0
  %185 = vmatprep.subr.mxu0 0.0
  %186 = vmatpush1.msra.mxu0 0.0
  %187 = vmatprep.subr.mxu0 0.0
  %188 = vmatpush1.msra.mxu0 0.0
  %189 = vmatprep.subr.mxu0 0.0
  %190 = vmatpush1.msra.mxu0 0.0
  %191 = vmatprep.subr.mxu0 0.0
  %192 = vmatpush1.msra.mxu0 0.0
  %193 = vmatprep.subr.mxu0 0.0
  %194 = vmatpush1.msra.mxu0 0.0
  %195 = vmatprep.subr.mxu0 0.0
  %196 = vmatpush1.msra.mxu0 0.0
  %197 = vmatprep.subr.mxu0 0.0
  %198 = vmatpush1.msra.mxu0 0.0
  %199 = vmatprep.subr.mxu0 0.0
  %200 = vmatpush1.msra.mxu0 0.0
  %201 = vmatprep.subr.mxu0 0.0
  %202 = vmatpush1.msra.mxu0 0.0
  %203 = vmatprep.subr.mxu0 0.0
  %204 = vmatpush1.msra.mxu0 0.0
  %205 = vmatprep.subr.mxu0 0.0
  %206 = vmatpush1.msra.mxu0 0.0
  %207 = vmatprep.subr.mxu0 0.0
  %208 = vmatpush1.msra.mxu0 0.0
  %209 = vmatprep.subr.mxu0 0.0
  %210 = vmatpush1.msra.mxu0 0.0
  %211 = vmatprep.subr.mxu0 0.0
  %212 = vmatpush1.msra.mxu0 0.0
  %213 = vmatprep.subr.mxu0 0.0
  %214 = vmatpush1.msra.mxu0 0.0
  %215 = vmatprep.subr.mxu0 0.0
  %216 = vmatpush1.msra.mxu0 0.0
  %217 = vmatprep.subr.mxu0 0.0
  %218 = vmatpush1.msra.mxu0 0.0
  %219 = vmatprep.subr.mxu0 0.0
  %220 = vmatpush1.msra.mxu0 0.0
  %221 = vmatprep.subr.mxu0 0.0
  %222 = vmatpush1.msra.mxu0 0.0
  %223 = vmatprep.subr.mxu0 0.0
  %224 = vmatpush1.msra.mxu0 0.0
  %225 = vmatprep.subr.mxu0 0.0
  %226 = vmatpush1.msra.mxu0 0.0
  %227 = vmatprep.subr.mxu0 0.0
  %228 = vmatpush1.msra.mxu0 0.0
  %229 = vmatprep.mubr.f32.mxu0 0.0
  %230 = vmatmul.mubr.f32.gmra.mrb[0].mxu0 %v90
  %v231 = vpop.f32.mrb[0].mxu0
  %v232 = vadd.f32 0.0, %v231
  %v233 = vpop.f32.mrb[0].mxu0
  %234 = vmatprep.mubr.f32.mxu0 0.0
  %235 = vmatmul.mubr.f32.gmra.mrb[0].mxu0 %v93
  %v236 = vpop.f32.mrb[0].mxu0
  %v237 = vadd.f32 0.0, %v236
  %v238 = vpop.f32.mrb[0].mxu0
  %239 = vmatprep.mubr.f32.mxu0 0.0
  %240 = vmatmul.mubr.f32.gmra.mrb[0].mxu0 %v96
  %v241 = vpop.f32.mrb[0].mxu0
  %v242 = vadd.f32 0.0, %v241
  %v243 = vpop.f32.mrb[0].mxu0
  %244 = vmatprep.mubr.f32.mxu0 0.0
  %245 = vmatmul.mubr.f32.gmra.mrb[0].mxu0 %v99
  %v246 = vpop.f32.mrb[0].mxu0
  %v247 = vadd.f32 0.0, %v246
  %v248 = vpop.f32.mrb[0].mxu0
  %249 = vmatprep.mubr.f32.mxu0 0.0
  %250 = vmatmul.mubr.f32.gmra.mrb[0].mxu0 %v102
  %v251 = vpop.f32.mrb[0].mxu0
  %v252 = vadd.f32 0.0, %v251
  %v253 = vpop.f32.mrb[0].mxu0
  %254 = vmatprep.mubr.f32.mxu0 0.0
  %255 = vmatmul.mubr.f32.gmra.mrb[0].mxu0 %v105
  %v256 = vpop.f32.mrb[0].mxu0
  %v257 = vadd.f32 0.0, %v256
  %v258 = vpop.f32.mrb[0].mxu0
  %259 = vmatprep.mubr.f32.mxu0 0.0
  %260 = vmatmul.mubr.f32.gmra.mrb[0].mxu0 %v108
  %v261 = vpop.f32.mrb[0].mxu0
  %v262 = vadd.f32 0.0, %v261
  %v263 = vpop.f32.mrb[0].mxu0
  %264 = vmatprep.mubr.f32.mxu0 0.0
  %265 = vmatmul.mubr.f32.gmra.mrb[0].mxu0 %v111
  %v266 = vpop.f32.mrb[0].mxu0
  %v267 = vadd.f32 0.0, %v266
  %v268 = vpop.f32.mrb[0].mxu0
  %269 = vmatprep.mubr.f32.mxu0 0.0
  %270 = vmatmul.mubr.f32.gmra.mrb[0].mxu0 %v114
  %v271 = vpop.f32.mrb[0].mxu0
  %v272 = vadd.f32 0.0, %v271
  %v273 = vpop.f32.mrb[0].mxu0
  %274 = vmatprep.mubr.f32.mxu0 0.0
  %275 = vmatmul.mubr.f32.gmra.mrb[0].mxu0 %v117
  %v276 = vpop.f32.mrb[0].mxu0
  %v277 = vadd.f32 0.0, %v276
  %v278 = vpop.f32.mrb[0].mxu0
  %279 = vmatprep.mubr.f32.mxu0 0.0
  %280 = vmatmul.mubr.f32.gmra.mrb[0].mxu0 %v120
  %v281 = vpop.f32.mrb[0].mxu0
  %v282 = vadd.f32 0.0, %v281
  %v283 = vpop.f32.mrb[0].mxu0
  %284 = vmatprep.mubr.f32.mxu0 0.0
  %285 = vmatmul.mubr.f32.gmra.mrb[0].mxu0 %v123
  %v286 = vpop.f32.mrb[0].mxu0
  %v287 = vadd.f32 0.0, %v286
  %v288 = vpop.f32.mrb[0].mxu0
  %289 = vmatprep.mubr.f32.mxu0 0.0
  %290 = vmatmul.mubr.f32.gmra.mrb[0].mxu0 %v126
  %v291 = vpop.f32.mrb[0].mxu0
  %v292 = vadd.f32 0.0, %v291
  %v293 = vpop.f32.mrb[0].mxu0
  %294 = vmatprep.mubr.f32.mxu0 0.0
  %295 = vmatmul.mubr.f32.gmra.mrb[0].mxu0 %v129
  %v296 = vpop.f32.mrb[0].mxu0
  %v297 = vadd.f32 0.0, %v296
  %v298 = vpop.f32.mrb[0].mxu0
  %299 = vmatprep.mubr.f32.mxu0 0.0
  %300 = vmatmul.mubr.f32.gmra.mrb[0].mxu0 %v132
  %v301 = vpop.f32.mrb[0].mxu0
  %v302 = vadd.f32 0.0, %v301
  %v303 = vpop.f32.mrb[0].mxu0
  %304 = vmatprep.mubr.f32.mxu0 0.0
  %305 = vmatmul.mubr.f32.gmra.mrb[0].mxu0 %v135
  %v306 = vpop.f32.mrb[0].mxu0
  %v307 = vadd.f32 0.0, %v306
  %v308 = vpop.f32.mrb[0].mxu0
  %309 = vmatprep.mubr.f32.mxu0 0.0
  %310 = vmatmul.mubr.f32.gmra.mrb[0].mxu0 %v138
  %v311 = vpop.f32.mrb[0].mxu0
  %v312 = vadd.f32 0.0, %v311
  %v313 = vpop.f32.mrb[0].mxu0
  %314 = vmatprep.mubr.f32.mxu0 0.0
  %315 = vmatmul.mubr.f32.gmra.mrb[0].mxu0 %v141
  %v316 = vpop.f32.mrb[0].mxu0
  %v317 = vadd.f32 0.0, %v316
  %v318 = vpop.f32.mrb[0].mxu0
  %319 = vmatprep.mubr.f32.mxu0 0.0
  %320 = vmatmul.mubr.f32.gmra.mrb[0].mxu0 %v144
  %v321 = vpop.f32.mrb[0].mxu0
  %v322 = vadd.f32 0.0, %v321
  %v323 = vpop.f32.mrb[0].mxu0
  %324 = vmatprep.mubr.f32.mxu0 0.0
  %325 = vmatmul.mubr.f32.gmra.mrb[0].mxu0 %v147
  %v326 = vpop.f32.mrb[0].mxu0
  %v327 = vadd.f32 0.0, %v326
  %v328 = vpop.f32.mrb[0].mxu0
  %329 = vmatprep.mubr.f32.mxu0 0.0
  %330 = vmatmul.mubr.f32.gmra.mrb[0].mxu0 %v150
  %v331 = vpop.f32.mrb[0].mxu0
  %v332 = vadd.f32 0.0, %v331
  %v333 = vpop.f32.mrb[0].mxu0
  %334 = vmatprep.mubr.f32.mxu0 0.0
  %335 = vmatmul.mubr.f32.gmra.mrb[0].mxu0 %v153
  %v336 = vpop.f32.mrb[0].mxu0
  %v337 = vadd.f32 0.0, %v336
  %v338 = vpop.f32.mrb[0].mxu0
  %339 = vmatprep.mubr.f32.mxu0 0.0
  %340 = vmatmul.mubr.f32.gmra.mrb[0].mxu0 %v156
  %v341 = vpop.f32.mrb[0].mxu0
  %v342 = vadd.f32 0.0, %v341
  %v343 = vpop.f32.mrb[0].mxu0
  %344 = vmatprep.mubr.f32.mxu0 0.0
  %345 = vmatmul.mubr.f32.gmra.mrb[0].mxu0 %v159
  %v346 = vpop.f32.mrb[0].mxu0
  %v347 = vadd.f32 0.0, %v346
  %v348 = vpop.f32.mrb[0].mxu0
  %349 = vdwg.mxu0
  %v351 = vsel %vm88, 0.0, 0
  %v354 = vsel %vm161, %v86, 0
  %356 = vmatprep.subr.mxu0 0.0
  %357 = vmatpush1.msra.mxu0 %v354
  %358 = vmatprep.subr.mxu0 0.0
  %359 = vmatpush1.msra.mxu0 0.0
  %360 = vmatprep.subr.mxu0 0.0
  %361 = vmatpush1.msra.mxu0 0.0
  %362 = vmatprep.subr.mxu0 0.0
  %363 = vmatpush1.msra.mxu0 0.0
  %364 = vmatprep.subr.mxu0 0.0
  %365 = vmatpush1.msra.mxu0 0.0
  %366 = vmatprep.subr.mxu0 0.0
  %367 = vmatpush1.msra.mxu0 0.0
  %368 = vmatprep.subr.mxu0 0.0
  %369 = vmatpush1.msra.mxu0 0.0
  %370 = vmatprep.subr.mxu0 0.0
  %371 = vmatpush1.msra.mxu0 0.0
  %372 = vmatprep.subr.mxu0 0.0
  %373 = vmatpush1.msra.mxu0 0.0
  %374 = vmatprep.subr.mxu0 0.0
  %375 = vmatpush1.msra.mxu0 0.0
  %376 = vmatprep.subr.mxu0 0.0
  %377 = vmatpush1.msra.mxu0 0.0
  %378 = vmatprep.subr.mxu0 0.0
  %379 = vmatpush1.msra.mxu0 0.0
  %380 = vmatprep.subr.mxu0 0.0
  %381 = vmatpush1.msra.mxu0 0.0
  %382 = vmatprep.subr.mxu0 0.0
  %383 = vmatpush1.msra.mxu0 0.0
  %384 = vmatprep.subr.mxu0 0.0
  %385 = vmatpush1.msra.mxu0 0.0
  %386 = vmatprep.subr.mxu0 0.0
  %387 = vmatpush1.msra.mxu0 0.0
  %388 = vmatprep.subr.mxu0 0.0
  %389 = vmatpush1.msra.mxu0 0.0
  %390 = vmatprep.subr.mxu0 0.0
  %391 = vmatpush1.msra.mxu0 0.0
  %392 = vmatprep.subr.mxu0 0.0
  %393 = vmatpush1.msra.mxu0 0.0
  %394 = vmatprep.subr.mxu0 0.0
  %395 = vmatpush1.msra.mxu0 0.0
  %396 = vmatprep.subr.mxu0 0.0
  %397 = vmatpush1.msra.mxu0 0.0
  %398 = vmatprep.subr.mxu0 0.0
  %399 = vmatpush1.msra.mxu0 0.0
  %400 = vmatprep.subr.mxu0 0.0
  %401 = vmatpush1.msra.mxu0 0.0
  %402 = vmatprep.subr.mxu0 0.0
  %403 = vmatpush1.msra.mxu0 0.0
  %404 = vmatprep.subr.mxu0 0.0
  %405 = vmatpush1.msra.mxu0 0.0
  %406 = vmatprep.subr.mxu0 0.0
  %407 = vmatpush1.msra.mxu0 0.0
  %408 = vmatprep.subr.mxu0 0.0
  %409 = vmatpush1.msra.mxu0 0.0
  %410 = vmatprep.subr.mxu0 0.0
  %411 = vmatpush1.msra.mxu0 0.0
  %412 = vmatprep.subr.mxu0 0.0
  %413 = vmatpush1.msra.mxu0 0.0
  %414 = vmatprep.subr.mxu0 0.0
  %415 = vmatpush1.msra.mxu0 0.0
  %416 = vmatprep.subr.mxu0 0.0
  %417 = vmatpush1.msra.mxu0 0.0
  %418 = vmatprep.subr.mxu0 0.0
  %419 = vmatpush1.msra.mxu0 0.0
  %420 = vmatprep.mubr.f32.mxu0 0.0
  %421 = vmatmul.mubr.f32.gmra.mrb[0].mxu0 %v351
  %v422 = vpop.f32.mrb[0].mxu0
  %v423 = vadd.f32 %v232, %v422
  %v424 = vpop.f32.mrb[0].mxu0
  %425 = vmatprep.mubr.f32.mxu0 0.0
  %426 = vmatmul.mubr.f32.gmra.mrb[0].mxu0 %v90
  %v427 = vpop.f32.mrb[0].mxu0
  %v428 = vadd.f32 %v237, %v427
  %v429 = vpop.f32.mrb[0].mxu0
  %430 = vmatprep.mubr.f32.mxu0 0.0
  %431 = vmatmul.mubr.f32.gmra.mrb[0].mxu0 %v93
  %v432 = vpop.f32.mrb[0].mxu0
  %v433 = vadd.f32 %v242, %v432
  %v434 = vpop.f32.mrb[0].mxu0
  %435 = vmatprep.mubr.f32.mxu0 0.0
  %436 = vmatmul.mubr.f32.gmra.mrb[0].mxu0 %v96
  %v437 = vpop.f32.mrb[0].mxu0
  %v438 = vadd.f32 %v247, %v437
  %v439 = vpop.f32.mrb[0].mxu0
  %440 = vmatprep.mubr.f32.mxu0 0.0
  %441 = vmatmul.mubr.f32.gmra.mrb[0].mxu0 %v99
  %v442 = vpop.f32.mrb[0].mxu0
  %v443 = vadd.f32 %v252, %v442
  %v444 = vpop.f32.mrb[0].mxu0
  %445 = vmatprep.mubr.f32.mxu0 0.0
  %446 = vmatmul.mubr.f32.gmra.mrb[0].mxu0 %v102
  %v447 = vpop.f32.mrb[0].mxu0
  %v448 = vadd.f32 %v257, %v447
  %v449 = vpop.f32.mrb[0].mxu0
  %450 = vmatprep.mubr.f32.mxu0 0.0
  %451 = vmatmul.mubr.f32.gmra.mrb[0].mxu0 %v105
  %v452 = vpop.f32.mrb[0].mxu0
  %v453 = vadd.f32 %v262, %v452
  %v454 = vpop.f32.mrb[0].mxu0
  %455 = vmatprep.mubr.f32.mxu0 0.0
  %456 = vmatmul.mubr.f32.gmra.mrb[0].mxu0 %v108
  %v457 = vpop.f32.mrb[0].mxu0
  %v458 = vadd.f32 %v267, %v457
  %v459 = vpop.f32.mrb[0].mxu0
  %460 = vmatprep.mubr.f32.mxu0 0.0
  %461 = vmatmul.mubr.f32.gmra.mrb[0].mxu0 %v111
  %v462 = vpop.f32.mrb[0].mxu0
  %v463 = vadd.f32 %v272, %v462
  %v464 = vpop.f32.mrb[0].mxu0
  %465 = vmatprep.mubr.f32.mxu0 0.0
  %466 = vmatmul.mubr.f32.gmra.mrb[0].mxu0 %v114
  %v467 = vpop.f32.mrb[0].mxu0
  %v468 = vadd.f32 %v277, %v467
  %v469 = vpop.f32.mrb[0].mxu0
  %470 = vmatprep.mubr.f32.mxu0 0.0
  %471 = vmatmul.mubr.f32.gmra.mrb[0].mxu0 %v117
  %v472 = vpop.f32.mrb[0].mxu0
  %v473 = vadd.f32 %v282, %v472
  %v474 = vpop.f32.mrb[0].mxu0
  %475 = vmatprep.mubr.f32.mxu0 0.0
  %476 = vmatmul.mubr.f32.gmra.mrb[0].mxu0 %v120
  %v477 = vpop.f32.mrb[0].mxu0
  %v478 = vadd.f32 %v287, %v477
  %v479 = vpop.f32.mrb[0].mxu0
  %480 = vmatprep.mubr.f32.mxu0 0.0
  %481 = vmatmul.mubr.f32.gmra.mrb[0].mxu0 %v123
  %v482 = vpop.f32.mrb[0].mxu0
  %v483 = vadd.f32 %v292, %v482
  %v484 = vpop.f32.mrb[0].mxu0
  %485 = vmatprep.mubr.f32.mxu0 0.0
  %486 = vmatmul.mubr.f32.gmra.mrb[0].mxu0 %v126
  %v487 = vpop.f32.mrb[0].mxu0
  %v488 = vadd.f32 %v297, %v487
  %v489 = vpop.f32.mrb[0].mxu0
  %490 = vmatprep.mubr.f32.mxu0 0.0
  %491 = vmatmul.mubr.f32.gmra.mrb[0].mxu0 %v129
  %v492 = vpop.f32.mrb[0].mxu0
  %v493 = vadd.f32 %v302, %v492
  %v494 = vpop.f32.mrb[0].mxu0
  %495 = vmatprep.mubr.f32.mxu0 0.0
  %496 = vmatmul.mubr.f32.gmra.mrb[0].mxu0 %v132
  %v497 = vpop.f32.mrb[0].mxu0
  %v498 = vadd.f32 %v307, %v497
  %v499 = vpop.f32.mrb[0].mxu0
  %500 = vmatprep.mubr.f32.mxu0 0.0
  %501 = vmatmul.mubr.f32.gmra.mrb[0].mxu0 %v135
  %v502 = vpop.f32.mrb[0].mxu0
  %v503 = vadd.f32 %v312, %v502
  %v504 = vpop.f32.mrb[0].mxu0
  %505 = vmatprep.mubr.f32.mxu0 0.0
  %506 = vmatmul.mubr.f32.gmra.mrb[0].mxu0 %v138
  %v507 = vpop.f32.mrb[0].mxu0
  %v508 = vadd.f32 %v317, %v507
  %v509 = vpop.f32.mrb[0].mxu0
  %510 = vmatprep.mubr.f32.mxu0 0.0
  %511 = vmatmul.mubr.f32.gmra.mrb[0].mxu0 %v141
  %v512 = vpop.f32.mrb[0].mxu0
  %v513 = vadd.f32 %v322, %v512
  %v514 = vpop.f32.mrb[0].mxu0
  %515 = vmatprep.mubr.f32.mxu0 0.0
  %516 = vmatmul.mubr.f32.gmra.mrb[0].mxu0 %v144
  %v517 = vpop.f32.mrb[0].mxu0
  %v518 = vadd.f32 %v327, %v517
  %v519 = vpop.f32.mrb[0].mxu0
  %520 = vmatprep.mubr.f32.mxu0 0.0
  %521 = vmatmul.mubr.f32.gmra.mrb[0].mxu0 %v147
  %v522 = vpop.f32.mrb[0].mxu0
  %v523 = vadd.f32 %v332, %v522
  %v524 = vpop.f32.mrb[0].mxu0
  %525 = vmatprep.mubr.f32.mxu0 0.0
  %526 = vmatmul.mubr.f32.gmra.mrb[0].mxu0 %v150
  %v527 = vpop.f32.mrb[0].mxu0
  %v528 = vadd.f32 %v337, %v527
  %v529 = vpop.f32.mrb[0].mxu0
  %530 = vmatprep.mubr.f32.mxu0 0.0
  %531 = vmatmul.mubr.f32.gmra.mrb[0].mxu0 %v153
  %v532 = vpop.f32.mrb[0].mxu0
  %v533 = vadd.f32 %v342, %v532
  %v534 = vpop.f32.mrb[0].mxu0
  %535 = vmatprep.mubr.f32.mxu0 0.0
  %536 = vmatmul.mubr.f32.gmra.mrb[0].mxu0 %v156
  %v537 = vpop.f32.mrb[0].mxu0
  %v538 = vadd.f32 %v347, %v537
  %v539 = vpop.f32.mrb[0].mxu0
  %540 = vdwg.mxu0
  %v541 = vld [vmem:[%s3] sm:$0xf]
  %v543 = vsel %vm161, %v541, 0
  %545 = vmatprep.subr.mxu0 0.0
  %546 = vmatpush1.msra.mxu0 %v543
  %547 = vmatprep.subr.mxu0 0.0
  %548 = vmatpush1.msra.mxu0 0.0
  %549 = vmatprep.subr.mxu0 0.0
  %550 = vmatpush1.msra.mxu0 0.0
  %551 = vmatprep.subr.mxu0 0.0
  %552 = vmatpush1.msra.mxu0 0.0
  %553 = vmatprep.subr.mxu0 0.0
  %554 = vmatpush1.msra.mxu0 0.0
  %555 = vmatprep.subr.mxu0 0.0
  %556 = vmatpush1.msra.mxu0 0.0
  %557 = vmatprep.subr.mxu0 0.0
  %558 = vmatpush1.msra.mxu0 0.0
  %559 = vmatprep.subr.mxu0 0.0
  %560 = vmatpush1.msra.mxu0 0.0
  %561 = vmatprep.subr.mxu0 0.0
  %562 = vmatpush1.msra.mxu0 0.0
  %563 = vmatprep.subr.mxu0 0.0
  %564 = vmatpush1.msra.mxu0 0.0
  %565 = vmatprep.subr.mxu0 0.0
  %566 = vmatpush1.msra.mxu0 0.0
  %567 = vmatprep.subr.mxu0 0.0
  %568 = vmatpush1.msra.mxu0 0.0
  %569 = vmatprep.subr.mxu0 0.0
  %570 = vmatpush1.msra.mxu0 0.0
  %571 = vmatprep.subr.mxu0 0.0
  %572 = vmatpush1.msra.mxu0 0.0
  %573 = vmatprep.subr.mxu0 0.0
  %574 = vmatpush1.msra.mxu0 0.0
  %575 = vmatprep.subr.mxu0 0.0
  %576 = vmatpush1.msra.mxu0 0.0
  %577 = vmatprep.subr.mxu0 0.0
  %578 = vmatpush1.msra.mxu0 0.0
  %579 = vmatprep.subr.mxu0 0.0
  %580 = vmatpush1.msra.mxu0 0.0
  %581 = vmatprep.subr.mxu0 0.0
  %582 = vmatpush1.msra.mxu0 0.0
  %583 = vmatprep.subr.mxu0 0.0
  %584 = vmatpush1.msra.mxu0 0.0
  %585 = vmatprep.subr.mxu0 0.0
  %586 = vmatpush1.msra.mxu0 0.0
  %587 = vmatprep.subr.mxu0 0.0
  %588 = vmatpush1.msra.mxu0 0.0
  %589 = vmatprep.subr.mxu0 0.0
  %590 = vmatpush1.msra.mxu0 0.0
  %591 = vmatprep.subr.mxu0 0.0
  %592 = vmatpush1.msra.mxu0 0.0
  %593 = vmatprep.subr.mxu0 0.0
  %594 = vmatpush1.msra.mxu0 0.0
  %595 = vmatprep.subr.mxu0 0.0
  %596 = vmatpush1.msra.mxu0 0.0
  %597 = vmatprep.subr.mxu0 0.0
  %598 = vmatpush1.msra.mxu0 0.0
  %599 = vmatprep.subr.mxu0 0.0
  %600 = vmatpush1.msra.mxu0 0.0
  %601 = vmatprep.subr.mxu0 0.0
  %602 = vmatpush1.msra.mxu0 0.0
  %603 = vmatprep.subr.mxu0 0.0
  %604 = vmatpush1.msra.mxu0 0.0
  %605 = vmatprep.subr.mxu0 0.0
  %606 = vmatpush1.msra.mxu0 0.0
  %607 = vmatprep.subr.mxu0 0.0
  %608 = vmatpush1.msra.mxu0 0.0
  %609 = vmatprep.mubr.f32.mxu0 0.0
  %610 = vmatmul.mubr.f32.gmra.mrb[0].mxu0 %v93
  %v611 = vpop.f32.mrb[0].mxu0
  %v612 = vadd.f32 0.0, %v611
  %v613 = vpop.f32.mrb[0].mxu0
  %614 = vmatprep.mubr.f32.mxu0 0.0
  %615 = vmatmul.mubr.f32.gmra.mrb[0].mxu0 %v96
  %v616 = vpop.f32.mrb[0].mxu0
  %v617 = vadd.f32 0.0, %v616
  %v618 = vpop.f32.mrb[0].mxu0
  %619 = vmatprep.mubr.f32.mxu0 0.0
  %620 = vmatmul.mubr.f32.gmra.mrb[0].mxu0 %v99
  %v621 = vpop.f32.mrb[0].mxu0
  %v622 = vadd.f32 0.0, %v621
  %v623 = vpop.f32.mrb[0].mxu0
  %624 = vmatprep.mubr.f32.mxu0 0.0
  %625 = vmatmul.mubr.f32.gmra.mrb[0].mxu0 %v102
  %v626 = vpop.f32.mrb[0].mxu0
  %v627 = vadd.f32 0.0, %v626
  %v628 = vpop.f32.mrb[0].mxu0
  %629 = vmatprep.mubr.f32.mxu0 0.0
  %630 = vmatmul.mubr.f32.gmra.mrb[0].mxu0 %v105
  %v631 = vpop.f32.mrb[0].mxu0
  %v632 = vadd.f32 0.0, %v631
  %v633 = vpop.f32.mrb[0].mxu0
  %634 = vmatprep.mubr.f32.mxu0 0.0
  %635 = vmatmul.mubr.f32.gmra.mrb[0].mxu0 %v108
  %v636 = vpop.f32.mrb[0].mxu0
  %v637 = vadd.f32 0.0, %v636
  %v638 = vpop.f32.mrb[0].mxu0
  %639 = vmatprep.mubr.f32.mxu0 0.0
  %640 = vmatmul.mubr.f32.gmra.mrb[0].mxu0 %v111
  %v641 = vpop.f32.mrb[0].mxu0
  %v642 = vadd.f32 0.0, %v641
  %v643 = vpop.f32.mrb[0].mxu0
  %644 = vmatprep.mubr.f32.mxu0 0.0
  %645 = vmatmul.mubr.f32.gmra.mrb[0].mxu0 %v114
  %v646 = vpop.f32.mrb[0].mxu0
  %v647 = vadd.f32 0.0, %v646
  %v648 = vpop.f32.mrb[0].mxu0
  %649 = vmatprep.mubr.f32.mxu0 0.0
  %650 = vmatmul.mubr.f32.gmra.mrb[0].mxu0 %v117
  %v651 = vpop.f32.mrb[0].mxu0
  %v652 = vadd.f32 0.0, %v651
  %v653 = vpop.f32.mrb[0].mxu0
  %654 = vmatprep.mubr.f32.mxu0 0.0
  %655 = vmatmul.mubr.f32.gmra.mrb[0].mxu0 %v120
  %v656 = vpop.f32.mrb[0].mxu0
  %v657 = vadd.f32 0.0, %v656
  %v658 = vpop.f32.mrb[0].mxu0
  %659 = vmatprep.mubr.f32.mxu0 0.0
  %660 = vmatmul.mubr.f32.gmra.mrb[0].mxu0 %v123
  %v661 = vpop.f32.mrb[0].mxu0
  %v662 = vadd.f32 0.0, %v661
  %v663 = vpop.f32.mrb[0].mxu0
  %664 = vmatprep.mubr.f32.mxu0 0.0
  %665 = vmatmul.mubr.f32.gmra.mrb[0].mxu0 %v126
  %v666 = vpop.f32.mrb[0].mxu0
  %v667 = vadd.f32 0.0, %v666
  %v668 = vpop.f32.mrb[0].mxu0
  %669 = vmatprep.mubr.f32.mxu0 0.0
  %670 = vmatmul.mubr.f32.gmra.mrb[0].mxu0 %v129
  %v671 = vpop.f32.mrb[0].mxu0
  %v672 = vadd.f32 0.0, %v671
  %v673 = vpop.f32.mrb[0].mxu0
  %674 = vmatprep.mubr.f32.mxu0 0.0
  %675 = vmatmul.mubr.f32.gmra.mrb[0].mxu0 %v132
  %v676 = vpop.f32.mrb[0].mxu0
  %v677 = vadd.f32 0.0, %v676
  %v678 = vpop.f32.mrb[0].mxu0
  %679 = vmatprep.mubr.f32.mxu0 0.0
  %680 = vmatmul.mubr.f32.gmra.mrb[0].mxu0 %v135
  %v681 = vpop.f32.mrb[0].mxu0
  %v682 = vadd.f32 0.0, %v681
  %v683 = vpop.f32.mrb[0].mxu0
  %684 = vmatprep.mubr.f32.mxu0 0.0
  %685 = vmatmul.mubr.f32.gmra.mrb[0].mxu0 %v138
  %v686 = vpop.f32.mrb[0].mxu0
  %v687 = vadd.f32 0.0, %v686
  %v688 = vpop.f32.mrb[0].mxu0
  %689 = vmatprep.mubr.f32.mxu0 0.0
  %690 = vmatmul.mubr.f32.gmra.mrb[0].mxu0 %v141
  %v691 = vpop.f32.mrb[0].mxu0
  %v692 = vadd.f32 0.0, %v691
  %v693 = vpop.f32.mrb[0].mxu0
  %694 = vmatprep.mubr.f32.mxu0 0.0
  %695 = vmatmul.mubr.f32.gmra.mrb[0].mxu0 %v144
  %v696 = vpop.f32.mrb[0].mxu0
  %v697 = vadd.f32 0.0, %v696
  %v698 = vpop.f32.mrb[0].mxu0
  %699 = vmatprep.mubr.f32.mxu0 0.0
  %700 = vmatmul.mubr.f32.gmra.mrb[0].mxu0 %v147
  %v701 = vpop.f32.mrb[0].mxu0
  %v702 = vadd.f32 0.0, %v701
  %v703 = vpop.f32.mrb[0].mxu0
  %704 = vmatprep.mubr.f32.mxu0 0.0
  %705 = vmatmul.mubr.f32.gmra.mrb[0].mxu0 %v150
  %v706 = vpop.f32.mrb[0].mxu0
  %v707 = vadd.f32 0.0, %v706
  %v708 = vpop.f32.mrb[0].mxu0
  %709 = vmatprep.mubr.f32.mxu0 0.0
  %710 = vmatmul.mubr.f32.gmra.mrb[0].mxu0 %v153
  %v711 = vpop.f32.mrb[0].mxu0
  %v712 = vadd.f32 0.0, %v711
  %v713 = vpop.f32.mrb[0].mxu0
  %714 = vmatprep.mubr.f32.mxu0 0.0
  %715 = vmatmul.mubr.f32.gmra.mrb[0].mxu0 %v156
  %v716 = vpop.f32.mrb[0].mxu0
  %v717 = vadd.f32 0.0, %v716
  %v718 = vpop.f32.mrb[0].mxu0
  %719 = vmatprep.mubr.f32.mxu0 0.0
  %720 = vmatmul.mubr.f32.gmra.mrb[0].mxu0 %v159
  %v721 = vpop.f32.mrb[0].mxu0
  %v722 = vadd.f32 0.0, %v721
  %v723 = vpop.f32.mrb[0].mxu0
  %724 = vmatprep.mubr.f32.mxu0 0.0
  %725 = vmatmul.mubr.f32.gmra.mrb[0].mxu0 %v351
  %v726 = vpop.f32.mrb[0].mxu0
  %v727 = vadd.f32 0.0, %v726
  %v728 = vpop.f32.mrb[0].mxu0
  %729 = vdwg.mxu0
  %v730 = vadd.f32 %v423, %v612
  %v731 = vadd.f32 %v428, %v617
  %v732 = vadd.f32 %v433, %v622
  %v733 = vadd.f32 %v438, %v627
  %v734 = vadd.f32 %v443, %v632
  %v735 = vadd.f32 %v448, %v637
  %v736 = vadd.f32 %v453, %v642
  %v737 = vadd.f32 %v458, %v647
  %v738 = vadd.f32 %v463, %v652
  %v739 = vadd.f32 %v468, %v657
  %v740 = vadd.f32 %v473, %v662
  %v741 = vadd.f32 %v478, %v667
  %v742 = vadd.f32 %v483, %v672
  %v743 = vadd.f32 %v488, %v677
  %v744 = vadd.f32 %v493, %v682
  %v745 = vadd.f32 %v498, %v687
  %v746 = vadd.f32 %v503, %v692
  %v747 = vadd.f32 %v508, %v697
  %v748 = vadd.f32 %v513, %v702
  %v749 = vadd.f32 %v518, %v707
  %v750 = vadd.f32 %v523, %v712
  %v751 = vadd.f32 %v528, %v717
  %v752 = vadd.f32 %v533, %v722
  %v753 = vadd.f32 %v538, %v727
  %v754 = vld [vmem:[%s4] sm:$0x1]
  %v756 = vlaneseq
  %v757 = vshrl.u32 %v756, 7
  %v758 = vsub.s32 0, %v757
  %v759 = vrot.slane %v754, %v758
  %v761 = vadd.f32 %v730, %v759
  %v762 = vadd.f32 %v731, %v759
  %v763 = vadd.f32 %v732, %v759
  %v764 = vadd.f32 %v733, %v759
  %v765 = vadd.f32 %v734, %v759
  %v766 = vadd.f32 %v735, %v759
  %v767 = vadd.f32 %v736, %v759
  %v768 = vadd.f32 %v737, %v759
  %v769 = vadd.f32 %v738, %v759
  %v770 = vadd.f32 %v739, %v759
  %v771 = vadd.f32 %v740, %v759
  %v772 = vadd.f32 %v741, %v759
  %v773 = vadd.f32 %v742, %v759
  %v774 = vadd.f32 %v743, %v759
  %v775 = vadd.f32 %v744, %v759
  %v776 = vadd.f32 %v745, %v759
  %v777 = vadd.f32 %v746, %v759
  %v778 = vadd.f32 %v747, %v759
  %v779 = vadd.f32 %v748, %v759
  %v780 = vadd.f32 %v749, %v759
  %v781 = vadd.f32 %v750, %v759
  %v782 = vadd.f32 %v751, %v759
  %v783 = vadd.f32 %v752, %v759
  %v784 = vadd.f32 %v753, %v759
  %v785 = vmax.f32 %v761, 0.0
  %v786 = vmax.f32 %v762, 0.0
  %v787 = vmax.f32 %v763, 0.0
  %v788 = vmax.f32 %v764, 0.0
  %v789 = vmax.f32 %v765, 0.0
  %v790 = vmax.f32 %v766, 0.0
  %v791 = vmax.f32 %v767, 0.0
  %v792 = vmax.f32 %v768, 0.0
  %v793 = vmax.f32 %v769, 0.0
  %v794 = vmax.f32 %v770, 0.0
  %v795 = vmax.f32 %v771, 0.0
  %v796 = vmax.f32 %v772, 0.0
  %v797 = vmax.f32 %v773, 0.0
  %v798 = vmax.f32 %v774, 0.0
  %v799 = vmax.f32 %v775, 0.0
  %v800 = vmax.f32 %v776, 0.0
  %v801 = vmax.f32 %v777, 0.0
  %v802 = vmax.f32 %v778, 0.0
  %v803 = vmax.f32 %v779, 0.0
  %v804 = vmax.f32 %v780, 0.0
  %v805 = vmax.f32 %v781, 0.0
  %v806 = vmax.f32 %v782, 0.0
  %v807 = vmax.f32 %v783, 0.0
  %v808 = vmax.f32 %v784, 0.0
  %v809 = vmax.f32 %v785, %v786
  %v810 = vmax.f32 %v787, %v788
  %v811 = vmax.f32 %v789, %v790
  %v812 = vmax.f32 %v791, %v792
  %v813 = vmax.f32 %v793, %v794
  %v814 = vmax.f32 %v795, %v796
  %v815 = vmax.f32 %v797, %v798
  %v816 = vmax.f32 %v799, %v800
  %v817 = vmax.f32 %v801, %v802
  %v818 = vmax.f32 %v803, %v804
  %v819 = vmax.f32 %v805, %v806
  %v820 = vmax.f32 %v807, %v808
  %v821 = vld [vmem:[%s5] sm:$0xff]
  %v822 = vld [vmem:[%s5 + $0x8] sm:$0xff]
  %v823 = vld [vmem:[%s5 + $0x10] sm:$0xff]
  %v824 = vld [vmem:[%s5 + $0x18] sm:$0xff]
  %v825 = vld [vmem:[%s6] sm:$0xff]
  %v826 = vld [vmem:[%s6 + $0x8] sm:$0xff]
  %v827 = vld [vmem:[%s6 + $0x10] sm:$0xff]
  %v828 = vld [vmem:[%s6 + $0x18] sm:$0xff]
  %vm829 = vcmask 261120
  %v831 = vsel %vm829, %v809, 0
  %v834 = vsel %vm829, %v810, 0
  %v837 = vsel %vm829, %v811, 0
  %v840 = vsel %vm829, %v812, 0
  %v843 = vsel %vm829, %v813, 0
  %v846 = vsel %vm829, %v814, 0
  %v849 = vsel %vm829, %v815, 0
  %v852 = vsel %vm829, %v816, 0
  %v855 = vsel %vm829, %v817, 0
  %v858 = vsel %vm829, %v818, 0
  %v861 = vsel %vm829, %v819, 0
  %v864 = vsel %vm829, %v820, 0
  %866 = vmatprep.subr.mxu0 0.0
  %867 = vmatpush1.msra.mxu0 %v825
  %868 = vmatprep.subr.mxu0 0.0
  %869 = vmatpush1.msra.mxu0 %v826
  %870 = vmatprep.subr.mxu0 0.0
  %871 = vmatpush1.msra.mxu0 %v827
  %872 = vmatprep.subr.mxu0 0.0
  %873 = vmatpush1.msra.mxu0 %v828
  %874 = vmatprep.subr.mxu0 0.0
  %875 = vmatpush1.msra.mxu0 0.0
  %876 = vmatprep.subr.mxu0 0.0
  %877 = vmatpush1.msra.mxu0 0.0
  %878 = vmatprep.subr.mxu0 0.0
  %879 = vmatpush1.msra.mxu0 0.0
  %880 = vmatprep.subr.mxu0 0.0
  %881 = vmatpush1.msra.mxu0 0.0
  %882 = vmatprep.subr.mxu0 0.0
  %883 = vmatpush1.msra.mxu0 0.0
  %884 = vmatprep.subr.mxu0 0.0
  %885 = vmatpush1.msra.mxu0 0.0
  %886 = vmatprep.subr.mxu0 0.0
  %887 = vmatpush1.msra.mxu0 0.0
  %888 = vmatprep.subr.mxu0 0.0
  %889 = vmatpush1.msra.mxu0 0.0
  %890 = vmatprep.subr.mxu0 0.0
  %891 = vmatpush1.msra.mxu0 0.0
  %892 = vmatprep.subr.mxu0 0.0
  %893 = vmatpush1.msra.mxu0 0.0
  %894 = vmatprep.subr.mxu0 0.0
  %895 = vmatpush1.msra.mxu0 0.0
  %896 = vmatprep.subr.mxu0 0.0
  %897 = vmatpush1.msra.mxu0 0.0
  %898 = vmatprep.subr.mxu0 0.0
  %899 = vmatpush1.msra.mxu0 0.0
  %900 = vmatprep.subr.mxu0 0.0
  %901 = vmatpush1.msra.mxu0 0.0
  %902 = vmatprep.subr.mxu0 0.0
  %903 = vmatpush1.msra.mxu0 0.0
  %904 = vmatprep.subr.mxu0 0.0
  %905 = vmatpush1.msra.mxu0 0.0
  %906 = vmatprep.subr.mxu0 0.0
  %907 = vmatpush1.msra.mxu0 0.0
  %908 = vmatprep.subr.mxu0 0.0
  %909 = vmatpush1.msra.mxu0 0.0
  %910 = vmatprep.subr.mxu0 0.0
  %911 = vmatpush1.msra.mxu0 0.0
  %912 = vmatprep.subr.mxu0 0.0
  %913 = vmatpush1.msra.mxu0 0.0
  %914 = vmatprep.subr.mxu0 0.0
  %915 = vmatpush1.msra.mxu0 0.0
  %916 = vmatprep.subr.mxu0 0.0
  %917 = vmatpush1.msra.mxu0 0.0
  %918 = vmatprep.subr.mxu0 0.0
  %919 = vmatpush1.msra.mxu0 0.0
  %920 = vmatprep.subr.mxu0 0.0
  %921 = vmatpush1.msra.mxu0 0.0
  %922 = vmatprep.subr.mxu0 0.0
  %923 = vmatpush1.msra.mxu0 0.0
  %924 = vmatprep.subr.mxu0 0.0
  %925 = vmatpush1.msra.mxu0 0.0
  %926 = vmatprep.subr.mxu0 0.0
  %927 = vmatpush1.msra.mxu0 0.0
  %928 = vmatprep.subr.mxu0 0.0
  %929 = vmatpush1.msra.mxu0 0.0
  %930 = vmatprep.mubr.f32.mxu0 0.0
  %931 = vmatmul.mubr.f32.gmra.mrb[0].mxu0 %v831
  %v932 = vpop.f32.mrb[0].mxu0
  %v933 = vadd.f32 0.0, %v932
  %v934 = vpop.f32.mrb[0].mxu0
  %935 = vmatprep.mubr.f32.mxu0 0.0
  %936 = vmatmul.mubr.f32.gmra.mrb[0].mxu0 %v834
  %v937 = vpop.f32.mrb[0].mxu0
  %v938 = vadd.f32 0.0, %v937
  %v939 = vpop.f32.mrb[0].mxu0
  %940 = vmatprep.mubr.f32.mxu0 0.0
  %941 = vmatmul.mubr.f32.gmra.mrb[0].mxu0 %v837
  %v942 = vpop.f32.mrb[0].mxu0
  %v943 = vadd.f32 0.0, %v942
  %v944 = vpop.f32.mrb[0].mxu0
  %945 = vmatprep.mubr.f32.mxu0 0.0
  %946 = vmatmul.mubr.f32.gmra.mrb[0].mxu0 %v840
  %v947 = vpop.f32.mrb[0].mxu0
  %v948 = vadd.f32 0.0, %v947
  %v949 = vpop.f32.mrb[0].mxu0
  %950 = vmatprep.mubr.f32.mxu0 0.0
  %951 = vmatmul.mubr.f32.gmra.mrb[0].mxu0 %v843
  %v952 = vpop.f32.mrb[0].mxu0
  %v953 = vadd.f32 0.0, %v952
  %v954 = vpop.f32.mrb[0].mxu0
  %955 = vmatprep.mubr.f32.mxu0 0.0
  %956 = vmatmul.mubr.f32.gmra.mrb[0].mxu0 %v846
  %v957 = vpop.f32.mrb[0].mxu0
  %v958 = vadd.f32 0.0, %v957
  %v959 = vpop.f32.mrb[0].mxu0
  %960 = vmatprep.mubr.f32.mxu0 0.0
  %961 = vmatmul.mubr.f32.gmra.mrb[0].mxu0 %v849
  %v962 = vpop.f32.mrb[0].mxu0
  %v963 = vadd.f32 0.0, %v962
  %v964 = vpop.f32.mrb[0].mxu0
  %965 = vmatprep.mubr.f32.mxu0 0.0
  %966 = vmatmul.mubr.f32.gmra.mrb[0].mxu0 %v852
  %v967 = vpop.f32.mrb[0].mxu0
  %v968 = vadd.f32 0.0, %v967
  %v969 = vpop.f32.mrb[0].mxu0
  %970 = vmatprep.mubr.f32.mxu0 0.0
  %971 = vmatmul.mubr.f32.gmra.mrb[0].mxu0 %v855
  %v972 = vpop.f32.mrb[0].mxu0
  %v973 = vadd.f32 0.0, %v972
  %v974 = vpop.f32.mrb[0].mxu0
  %975 = vmatprep.mubr.f32.mxu0 0.0
  %976 = vmatmul.mubr.f32.gmra.mrb[0].mxu0 %v858
  %v977 = vpop.f32.mrb[0].mxu0
  %v978 = vadd.f32 0.0, %v977
  %v979 = vpop.f32.mrb[0].mxu0
  %980 = vmatprep.mubr.f32.mxu0 0.0
  %981 = vmatmul.mubr.f32.gmra.mrb[0].mxu0 %v861
  %v982 = vpop.f32.mrb[0].mxu0
  %v983 = vadd.f32 0.0, %v982
  %v984 = vpop.f32.mrb[0].mxu0
  %985 = vmatprep.mubr.f32.mxu0 0.0
  %986 = vmatmul.mubr.f32.gmra.mrb[0].mxu0 %v864
  %v987 = vpop.f32.mrb[0].mxu0
  %v988 = vadd.f32 0.0, %v987
  %v989 = vpop.f32.mrb[0].mxu0
  %990 = vdwg.mxu0
  %v991 = vsel %vm829, 0.0, 0
  %993 = vmatprep.subr.mxu0 0.0
  %994 = vmatpush1.msra.mxu0 %v821
  %995 = vmatprep.subr.mxu0 0.0
  %996 = vmatpush1.msra.mxu0 %v822
  %997 = vmatprep.subr.mxu0 0.0
  %998 = vmatpush1.msra.mxu0 %v823
  %999 = vmatprep.subr.mxu0 0.0
  %1000 = vmatpush1.msra.mxu0 %v824
  %1001 = vmatprep.subr.mxu0 0.0
  %1002 = vmatpush1.msra.mxu0 0.0
  %1003 = vmatprep.subr.mxu0 0.0
  %1004 = vmatpush1.msra.mxu0 0.0
  %1005 = vmatprep.subr.mxu0 0.0
  %1006 = vmatpush1.msra.mxu0 0.0
  %1007 = vmatprep.subr.mxu0 0.0
  %1008 = vmatpush1.msra.mxu0 0.0
  %1009 = vmatprep.subr.mxu0 0.0
  %1010 = vmatpush1.msra.mxu0 0.0
  %1011 = vmatprep.subr.mxu0 0.0
  %1012 = vmatpush1.msra.mxu0 0.0
  %1013 = vmatprep.subr.mxu0 0.0
  %1014 = vmatpush1.msra.mxu0 0.0
  %1015 = vmatprep.subr.mxu0 0.0
  %1016 = vmatpush1.msra.mxu0 0.0
  %1017 = vmatprep.subr.mxu0 0.0
  %1018 = vmatpush1.msra.mxu0 0.0
  %1019 = vmatprep.subr.mxu0 0.0
  %1020 = vmatpush1.msra.mxu0 0.0
  %1021 = vmatprep.subr.mxu0 0.0
  %1022 = vmatpush1.msra.mxu0 0.0
  %1023 = vmatprep.subr.mxu0 0.0
  %1024 = vmatpush1.msra.mxu0 0.0
  %1025 = vmatprep.subr.mxu0 0.0
  %1026 = vmatpush1.msra.mxu0 0.0
  %1027 = vmatprep.subr.mxu0 0.0
  %1028 = vmatpush1.msra.mxu0 0.0
  %1029 = vmatprep.subr.mxu0 0.0
  %1030 = vmatpush1.msra.mxu0 0.0
  %1031 = vmatprep.subr.mxu0 0.0
  %1032 = vmatpush1.msra.mxu0 0.0
  %1033 = vmatprep.subr.mxu0 0.0
  %1034 = vmatpush1.msra.mxu0 0.0
  %1035 = vmatprep.subr.mxu0 0.0
  %1036 = vmatpush1.msra.mxu0 0.0
  %1037 = vmatprep.subr.mxu0 0.0
  %1038 = vmatpush1.msra.mxu0 0.0
  %1039 = vmatprep.subr.mxu0 0.0
  %1040 = vmatpush1.msra.mxu0 0.0
  %1041 = vmatprep.subr.mxu0 0.0
  %1042 = vmatpush1.msra.mxu0 0.0
  %1043 = vmatprep.subr.mxu0 0.0
  %1044 = vmatpush1.msra.mxu0 0.0
  %1045 = vmatprep.subr.mxu0 0.0
  %1046 = vmatpush1.msra.mxu0 0.0
  %1047 = vmatprep.subr.mxu0 0.0
  %1048 = vmatpush1.msra.mxu0 0.0
  %1049 = vmatprep.subr.mxu0 0.0
  %1050 = vmatpush1.msra.mxu0 0.0
  %1051 = vmatprep.subr.mxu0 0.0
  %1052 = vmatpush1.msra.mxu0 0.0
  %1053 = vmatprep.subr.mxu0 0.0
  %1054 = vmatpush1.msra.mxu0 0.0
  %1055 = vmatprep.subr.mxu0 0.0
  %1056 = vmatpush1.msra.mxu0 0.0
  %1057 = vmatprep.mubr.f32.mxu0 0.0
  %1058 = vmatmul.mubr.f32.gmra.mrb[0].mxu0 %v991
  %v1059 = vpop.f32.mrb[0].mxu0
  %v1060 = vadd.f32 %v933, %v1059
  %v1061 = vpop.f32.mrb[0].mxu0
  %1062 = vmatprep.mubr.f32.mxu0 0.0
  %1063 = vmatmul.mubr.f32.gmra.mrb[0].mxu0 %v831
  %v1064 = vpop.f32.mrb[0].mxu0
  %v1065 = vadd.f32 %v938, %v1064
  %v1066 = vpop.f32.mrb[0].mxu0
  %1067 = vmatprep.mubr.f32.mxu0 0.0
  %1068 = vmatmul.mubr.f32.gmra.mrb[0].mxu0 %v834
  %v1069 = vpop.f32.mrb[0].mxu0
  %v1070 = vadd.f32 %v943, %v1069
  %v1071 = vpop.f32.mrb[0].mxu0
  %1072 = vmatprep.mubr.f32.mxu0 0.0
  %1073 = vmatmul.mubr.f32.gmra.mrb[0].mxu0 %v837
  %v1074 = vpop.f32.mrb[0].mxu0
  %v1075 = vadd.f32 %v948, %v1074
  %v1076 = vpop.f32.mrb[0].mxu0
  %1077 = vmatprep.mubr.f32.mxu0 0.0
  %1078 = vmatmul.mubr.f32.gmra.mrb[0].mxu0 %v840
  %v1079 = vpop.f32.mrb[0].mxu0
  %v1080 = vadd.f32 %v953, %v1079
  %v1081 = vpop.f32.mrb[0].mxu0
  %1082 = vmatprep.mubr.f32.mxu0 0.0
  %1083 = vmatmul.mubr.f32.gmra.mrb[0].mxu0 %v843
  %v1084 = vpop.f32.mrb[0].mxu0
  %v1085 = vadd.f32 %v958, %v1084
  %v1086 = vpop.f32.mrb[0].mxu0
  %1087 = vmatprep.mubr.f32.mxu0 0.0
  %1088 = vmatmul.mubr.f32.gmra.mrb[0].mxu0 %v846
  %v1089 = vpop.f32.mrb[0].mxu0
  %v1090 = vadd.f32 %v963, %v1089
  %v1091 = vpop.f32.mrb[0].mxu0
  %1092 = vmatprep.mubr.f32.mxu0 0.0
  %1093 = vmatmul.mubr.f32.gmra.mrb[0].mxu0 %v849
  %v1094 = vpop.f32.mrb[0].mxu0
  %v1095 = vadd.f32 %v968, %v1094
  %v1096 = vpop.f32.mrb[0].mxu0
  %1097 = vmatprep.mubr.f32.mxu0 0.0
  %1098 = vmatmul.mubr.f32.gmra.mrb[0].mxu0 %v852
  %v1099 = vpop.f32.mrb[0].mxu0
  %v1100 = vadd.f32 %v973, %v1099
  %v1101 = vpop.f32.mrb[0].mxu0
  %1102 = vmatprep.mubr.f32.mxu0 0.0
  %1103 = vmatmul.mubr.f32.gmra.mrb[0].mxu0 %v855
  %v1104 = vpop.f32.mrb[0].mxu0
  %v1105 = vadd.f32 %v978, %v1104
  %v1106 = vpop.f32.mrb[0].mxu0
  %1107 = vmatprep.mubr.f32.mxu0 0.0
  %1108 = vmatmul.mubr.f32.gmra.mrb[0].mxu0 %v858
  %v1109 = vpop.f32.mrb[0].mxu0
  %v1110 = vadd.f32 %v983, %v1109
  %v1111 = vpop.f32.mrb[0].mxu0
  %1112 = vmatprep.mubr.f32.mxu0 0.0
  %1113 = vmatmul.mubr.f32.gmra.mrb[0].mxu0 %v861
  %v1114 = vpop.f32.mrb[0].mxu0
  %v1115 = vadd.f32 %v988, %v1114
  %v1116 = vpop.f32.mrb[0].mxu0
  %1117 = vdwg.mxu0
  %v1118 = vld [vmem:[%s7] sm:$0xff]
  %v1119 = vld [vmem:[%s7 + $0x8] sm:$0xff]
  %v1120 = vld [vmem:[%s7 + $0x10] sm:$0xff]
  %v1121 = vld [vmem:[%s7 + $0x18] sm:$0xff]
  %1122 = vmatprep.subr.mxu0 0.0
  %1123 = vmatpush1.msra.mxu0 %v1118
  %1124 = vmatprep.subr.mxu0 0.0
  %1125 = vmatpush1.msra.mxu0 %v1119
  %1126 = vmatprep.subr.mxu0 0.0
  %1127 = vmatpush1.msra.mxu0 %v1120
  %1128 = vmatprep.subr.mxu0 0.0
  %1129 = vmatpush1.msra.mxu0 %v1121
  %1130 = vmatprep.subr.mxu0 0.0
  %1131 = vmatpush1.msra.mxu0 0.0
  %1132 = vmatprep.subr.mxu0 0.0
  %1133 = vmatpush1.msra.mxu0 0.0
  %1134 = vmatprep.subr.mxu0 0.0
  %1135 = vmatpush1.msra.mxu0 0.0
  %1136 = vmatprep.subr.mxu0 0.0
  %1137 = vmatpush1.msra.mxu0 0.0
  %1138 = vmatprep.subr.mxu0 0.0
  %1139 = vmatpush1.msra.mxu0 0.0
  %1140 = vmatprep.subr.mxu0 0.0
  %1141 = vmatpush1.msra.mxu0 0.0
  %1142 = vmatprep.subr.mxu0 0.0
  %1143 = vmatpush1.msra.mxu0 0.0
  %1144 = vmatprep.subr.mxu0 0.0
  %1145 = vmatpush1.msra.mxu0 0.0
  %1146 = vmatprep.subr.mxu0 0.0
  %1147 = vmatpush1.msra.mxu0 0.0
  %1148 = vmatprep.subr.mxu0 0.0
  %1149 = vmatpush1.msra.mxu0 0.0
  %1150 = vmatprep.subr.mxu0 0.0
  %1151 = vmatpush1.msra.mxu0 0.0
  %1152 = vmatprep.subr.mxu0 0.0
  %1153 = vmatpush1.msra.mxu0 0.0
  %1154 = vmatprep.subr.mxu0 0.0
  %1155 = vmatpush1.msra.mxu0 0.0
  %1156 = vmatprep.subr.mxu0 0.0
  %1157 = vmatpush1.msra.mxu0 0.0
  %1158 = vmatprep.subr.mxu0 0.0
  %1159 = vmatpush1.msra.mxu0 0.0
  %1160 = vmatprep.subr.mxu0 0.0
  %1161 = vmatpush1.msra.mxu0 0.0
  %1162 = vmatprep.subr.mxu0 0.0
  %1163 = vmatpush1.msra.mxu0 0.0
  %1164 = vmatprep.subr.mxu0 0.0
  %1165 = vmatpush1.msra.mxu0 0.0
  %1166 = vmatprep.subr.mxu0 0.0
  %1167 = vmatpush1.msra.mxu0 0.0
  %1168 = vmatprep.subr.mxu0 0.0
  %1169 = vmatpush1.msra.mxu0 0.0
  %1170 = vmatprep.subr.mxu0 0.0
  %1171 = vmatpush1.msra.mxu0 0.0
  %1172 = vmatprep.subr.mxu0 0.0
  %1173 = vmatpush1.msra.mxu0 0.0
  %1174 = vmatprep.subr.mxu0 0.0
  %1175 = vmatpush1.msra.mxu0 0.0
  %1176 = vmatprep.subr.mxu0 0.0
  %1177 = vmatpush1.msra.mxu0 0.0
  %1178 = vmatprep.subr.mxu0 0.0
  %1179 = vmatpush1.msra.mxu0 0.0
  %1180 = vmatprep.subr.mxu0 0.0
  %1181 = vmatpush1.msra.mxu0 0.0
  %1182 = vmatprep.subr.mxu0 0.0
  %1183 = vmatpush1.msra.mxu0 0.0
  %1184 = vmatprep.subr.mxu0 0.0
  %1185 = vmatpush1.msra.mxu0 0.0
  %1186 = vmatprep.mubr.f32.mxu0 0.0
  %1187 = vmatmul.mubr.f32.gmra.mrb[0].mxu0 %v834
  %v1188 = vpop.f32.mrb[0].mxu0
  %v1189 = vadd.f32 0.0, %v1188
  %v1190 = vpop.f32.mrb[0].mxu0
  %1191 = vmatprep.mubr.f32.mxu0 0.0
  %1192 = vmatmul.mubr.f32.gmra.mrb[0].mxu0 %v837
  %v1193 = vpop.f32.mrb[0].mxu0
  %v1194 = vadd.f32 0.0, %v1193
  %v1195 = vpop.f32.mrb[0].mxu0
  %1196 = vmatprep.mubr.f32.mxu0 0.0
  %1197 = vmatmul.mubr.f32.gmra.mrb[0].mxu0 %v840
  %v1198 = vpop.f32.mrb[0].mxu0
  %v1199 = vadd.f32 0.0, %v1198
  %v1200 = vpop.f32.mrb[0].mxu0
  %1201 = vmatprep.mubr.f32.mxu0 0.0
  %1202 = vmatmul.mubr.f32.gmra.mrb[0].mxu0 %v843
  %v1203 = vpop.f32.mrb[0].mxu0
  %v1204 = vadd.f32 0.0, %v1203
  %v1205 = vpop.f32.mrb[0].mxu0
  %1206 = vmatprep.mubr.f32.mxu0 0.0
  %1207 = vmatmul.mubr.f32.gmra.mrb[0].mxu0 %v846
  %v1208 = vpop.f32.mrb[0].mxu0
  %v1209 = vadd.f32 0.0, %v1208
  %v1210 = vpop.f32.mrb[0].mxu0
  %1211 = vmatprep.mubr.f32.mxu0 0.0
  %1212 = vmatmul.mubr.f32.gmra.mrb[0].mxu0 %v849
  %v1213 = vpop.f32.mrb[0].mxu0
  %v1214 = vadd.f32 0.0, %v1213
  %v1215 = vpop.f32.mrb[0].mxu0
  %1216 = vmatprep.mubr.f32.mxu0 0.0
  %1217 = vmatmul.mubr.f32.gmra.mrb[0].mxu0 %v852
  %v1218 = vpop.f32.mrb[0].mxu0
  %v1219 = vadd.f32 0.0, %v1218
  %v1220 = vpop.f32.mrb[0].mxu0
  %1221 = vmatprep.mubr.f32.mxu0 0.0
  %1222 = vmatmul.mubr.f32.gmra.mrb[0].mxu0 %v855
  %v1223 = vpop.f32.mrb[0].mxu0
  %v1224 = vadd.f32 0.0, %v1223
  %v1225 = vpop.f32.mrb[0].mxu0
  %1226 = vmatprep.mubr.f32.mxu0 0.0
  %1227 = vmatmul.mubr.f32.gmra.mrb[0].mxu0 %v858
  %v1228 = vpop.f32.mrb[0].mxu0
  %v1229 = vadd.f32 0.0, %v1228
  %v1230 = vpop.f32.mrb[0].mxu0
  %1231 = vmatprep.mubr.f32.mxu0 0.0
  %1232 = vmatmul.mubr.f32.gmra.mrb[0].mxu0 %v861
  %v1233 = vpop.f32.mrb[0].mxu0
  %v1234 = vadd.f32 0.0, %v1233
  %v1235 = vpop.f32.mrb[0].mxu0
  %1236 = vmatprep.mubr.f32.mxu0 0.0
  %1237 = vmatmul.mubr.f32.gmra.mrb[0].mxu0 %v864
  %v1238 = vpop.f32.mrb[0].mxu0
  %v1239 = vadd.f32 0.0, %v1238
  %v1240 = vpop.f32.mrb[0].mxu0
  %1241 = vmatprep.mubr.f32.mxu0 0.0
  %1242 = vmatmul.mubr.f32.gmra.mrb[0].mxu0 %v991
  %v1243 = vpop.f32.mrb[0].mxu0
  %v1244 = vadd.f32 0.0, %v1243
  %v1245 = vpop.f32.mrb[0].mxu0
  %1246 = vdwg.mxu0
  %v1247 = vadd.f32 %v1060, %v1189
  %v1248 = vadd.f32 %v1065, %v1194
  %v1249 = vadd.f32 %v1070, %v1199
  %v1250 = vadd.f32 %v1075, %v1204
  %v1251 = vadd.f32 %v1080, %v1209
  %v1252 = vadd.f32 %v1085, %v1214
  %v1253 = vadd.f32 %v1090, %v1219
  %v1254 = vadd.f32 %v1095, %v1224
  %v1255 = vadd.f32 %v1100, %v1229
  %v1256 = vadd.f32 %v1105, %v1234
  %v1257 = vadd.f32 %v1110, %v1239
  %v1258 = vadd.f32 %v1115, %v1244
  %v1259 = vld [vmem:[%s8] sm:$0x1]
  %v1261 = vlaneseq
  %v1262 = vshrl.u32 %v1261, 7
  %v1263 = vsub.s32 0, %v1262
  %v1264 = vrot.slane %v1259, %v1263
  %v1266 = vadd.f32 %v1247, %v1264
  %v1267 = vadd.f32 %v1248, %v1264
  %v1268 = vadd.f32 %v1249, %v1264
  %v1269 = vadd.f32 %v1250, %v1264
  %v1270 = vadd.f32 %v1251, %v1264
  %v1271 = vadd.f32 %v1252, %v1264
  %v1272 = vadd.f32 %v1253, %v1264
  %v1273 = vadd.f32 %v1254, %v1264
  %v1274 = vadd.f32 %v1255, %v1264
  %v1275 = vadd.f32 %v1256, %v1264
  %v1276 = vadd.f32 %v1257, %v1264
  %v1277 = vadd.f32 %v1258, %v1264
  %v1278 = vmax.f32 %v1266, 0.0
  %v1279 = vmax.f32 %v1267, 0.0
  %v1280 = vmax.f32 %v1268, 0.0
  %v1281 = vmax.f32 %v1269, 0.0
  %v1282 = vmax.f32 %v1270, 0.0
  %v1283 = vmax.f32 %v1271, 0.0
  %v1284 = vmax.f32 %v1272, 0.0
  %v1285 = vmax.f32 %v1273, 0.0
  %v1286 = vmax.f32 %v1274, 0.0
  %v1287 = vmax.f32 %v1275, 0.0
  %v1288 = vmax.f32 %v1276, 0.0
  %v1289 = vmax.f32 %v1277, 0.0
  %v1290 = vmax.f32 %v1278, %v1279
  %v1291 = vmax.f32 %v1280, %v1281
  %v1292 = vmax.f32 %v1282, %v1283
  %v1293 = vmax.f32 %v1284, %v1285
  %v1294 = vmax.f32 %v1286, %v1287
  %v1295 = vmax.f32 %v1288, %v1289
  %v1296 = vld [vmem:[%s9] sm:$0xff]
  %v1297 = vld [vmem:[%s9 + $0x8] sm:$0xff]
  %v1298 = vld [vmem:[%s9 + $0x10] sm:$0xff]
  %v1299 = vld [vmem:[%s9 + $0x18] sm:$0xff]
  %v1300 = vld [vmem:[%s9 + $0x20] sm:$0xff]
  %v1301 = vld [vmem:[%s9 + $0x28] sm:$0xff]
  %v1302 = vld [vmem:[%s9 + $0x30] sm:$0xff]
  %v1303 = vld [vmem:[%s9 + $0x38] sm:$0xff]
  %v1304 = vld [vmem:[%s10] sm:$0xff]
  %v1305 = vld [vmem:[%s10 + $0x8] sm:$0xff]
  %v1306 = vld [vmem:[%s10 + $0x10] sm:$0xff]
  %v1307 = vld [vmem:[%s10 + $0x18] sm:$0xff]
  %v1308 = vld [vmem:[%s10 + $0x20] sm:$0xff]
  %v1309 = vld [vmem:[%s10 + $0x28] sm:$0xff]
  %v1310 = vld [vmem:[%s10 + $0x30] sm:$0xff]
  %v1311 = vld [vmem:[%s10 + $0x38] sm:$0xff]
  %vm1312 = vcmask 523264
  %v1314 = vsel %vm1312, %v1290, 0
  %v1317 = vsel %vm1312, %v1291, 0
  %v1320 = vsel %vm1312, %v1292, 0
  %v1323 = vsel %vm1312, %v1293, 0
  %v1326 = vsel %vm1312, %v1294, 0
  %v1329 = vsel %vm1312, %v1295, 0
  %1331 = vmatprep.subr.mxu0 0.0
  %1332 = vmatpush1.msra.mxu0 %v1304
  %1333 = vmatprep.subr.mxu0 0.0
  %1334 = vmatpush1.msra.mxu0 %v1305
  %1335 = vmatprep.subr.mxu0 0.0
  %1336 = vmatpush1.msra.mxu0 %v1306
  %1337 = vmatprep.subr.mxu0 0.0
  %1338 = vmatpush1.msra.mxu0 %v1307
  %1339 = vmatprep.subr.mxu0 0.0
  %1340 = vmatpush1.msra.mxu0 %v1308
  %1341 = vmatprep.subr.mxu0 0.0
  %1342 = vmatpush1.msra.mxu0 %v1309
  %1343 = vmatprep.subr.mxu0 0.0
  %1344 = vmatpush1.msra.mxu0 %v1310
  %1345 = vmatprep.subr.mxu0 0.0
  %1346 = vmatpush1.msra.mxu0 %v1311
  %1347 = vmatprep.subr.mxu0 0.0
  %1348 = vmatpush1.msra.mxu0 0.0
  %1349 = vmatprep.subr.mxu0 0.0
  %1350 = vmatpush1.msra.mxu0 0.0
  %1351 = vmatprep.subr.mxu0 0.0
  %1352 = vmatpush1.msra.mxu0 0.0
  %1353 = vmatprep.subr.mxu0 0.0
  %1354 = vmatpush1.msra.mxu0 0.0
  %1355 = vmatprep.subr.mxu0 0.0
  %1356 = vmatpush1.msra.mxu0 0.0
  %1357 = vmatprep.subr.mxu0 0.0
  %1358 = vmatpush1.msra.mxu0 0.0
  %1359 = vmatprep.subr.mxu0 0.0
  %1360 = vmatpush1.msra.mxu0 0.0
  %1361 = vmatprep.subr.mxu0 0.0
  %1362 = vmatpush1.msra.mxu0 0.0
  %1363 = vmatprep.subr.mxu0 0.0
  %1364 = vmatpush1.msra.mxu0 0.0
  %1365 = vmatprep.subr.mxu0 0.0
  %1366 = vmatpush1.msra.mxu0 0.0
  %1367 = vmatprep.subr.mxu0 0.0
  %1368 = vmatpush1.msra.mxu0 0.0
  %1369 = vmatprep.subr.mxu0 0.0
  %1370 = vmatpush1.msra.mxu0 0.0
  %1371 = vmatprep.subr.mxu0 0.0
  %1372 = vmatpush1.msra.mxu0 0.0
  %1373 = vmatprep.subr.mxu0 0.0
  %1374 = vmatpush1.msra.mxu0 0.0
  %1375 = vmatprep.subr.mxu0 0.0
  %1376 = vmatpush1.msra.mxu0 0.0
  %1377 = vmatprep.subr.mxu0 0.0
  %1378 = vmatpush1.msra.mxu0 0.0
  %1379 = vmatprep.subr.mxu0 0.0
  %1380 = vmatpush1.msra.mxu0 0.0
  %1381 = vmatprep.subr.mxu0 0.0
  %1382 = vmatpush1.msra.mxu0 0.0
  %1383 = vmatprep.subr.mxu0 0.0
  %1384 = vmatpush1.msra.mxu0 0.0
  %1385 = vmatprep.subr.mxu0 0.0
  %1386 = vmatpush1.msra.mxu0 0.0
  %1387 = vmatprep.subr.mxu0 0.0
  %1388 = vmatpush1.msra.mxu0 0.0
  %1389 = vmatprep.subr.mxu0 0.0
  %1390 = vmatpush1.msra.mxu0 0.0
  %1391 = vmatprep.subr.mxu0 0.0
  %1392 = vmatpush1.msra.mxu0 0.0
  %1393 = vmatprep.subr.mxu0 0.0
  %1394 = vmatpush1.msra.mxu0 0.0
  %1395 = vmatprep.mubr.f32.mxu0 0.0
  %1396 = vmatmul.mubr.f32.gmra.mrb[0].mxu0 %v1314
  %v1397 = vpop.f32.mrb[0].mxu0
  %v1398 = vadd.f32 0.0, %v1397
  %v1399 = vpop.f32.mrb[0].mxu0
  %1400 = vmatprep.mubr.f32.mxu0 0.0
  %1401 = vmatmul.mubr.f32.gmra.mrb[0].mxu0 %v1317
  %v1402 = vpop.f32.mrb[0].mxu0
  %v1403 = vadd.f32 0.0, %v1402
  %v1404 = vpop.f32.mrb[0].mxu0
  %1405 = vmatprep.mubr.f32.mxu0 0.0
  %1406 = vmatmul.mubr.f32.gmra.mrb[0].mxu0 %v1320
  %v1407 = vpop.f32.mrb[0].mxu0
  %v1408 = vadd.f32 0.0, %v1407
  %v1409 = vpop.f32.mrb[0].mxu0
  %1410 = vmatprep.mubr.f32.mxu0 0.0
  %1411 = vmatmul.mubr.f32.gmra.mrb[0].mxu0 %v1323
  %v1412 = vpop.f32.mrb[0].mxu0
  %v1413 = vadd.f32 0.0, %v1412
  %v1414 = vpop.f32.mrb[0].mxu0
  %1415 = vmatprep.mubr.f32.mxu0 0.0
  %1416 = vmatmul.mubr.f32.gmra.mrb[0].mxu0 %v1326
  %v1417 = vpop.f32.mrb[0].mxu0
  %v1418 = vadd.f32 0.0, %v1417
  %v1419 = vpop.f32.mrb[0].mxu0
  %1420 = vmatprep.mubr.f32.mxu0 0.0
  %1421 = vmatmul.mubr.f32.gmra.mrb[0].mxu0 %v1329
  %v1422 = vpop.f32.mrb[0].mxu0
  %v1423 = vadd.f32 0.0, %v1422
  %v1424 = vpop.f32.mrb[0].mxu0
  %1425 = vdwg.mxu0
  %v1426 = vsel %vm1312, 0.0, 0
  %1428 = vmatprep.subr.mxu0 0.0
  %1429 = vmatpush1.msra.mxu0 %v1296
  %1430 = vmatprep.subr.mxu0 0.0
  %1431 = vmatpush1.msra.mxu0 %v1297
  %1432 = vmatprep.subr.mxu0 0.0
  %1433 = vmatpush1.msra.mxu0 %v1298
  %1434 = vmatprep.subr.mxu0 0.0
  %1435 = vmatpush1.msra.mxu0 %v1299
  %1436 = vmatprep.subr.mxu0 0.0
  %1437 = vmatpush1.msra.mxu0 %v1300
  %1438 = vmatprep.subr.mxu0 0.0
  %1439 = vmatpush1.msra.mxu0 %v1301
  %1440 = vmatprep.subr.mxu0 0.0
  %1441 = vmatpush1.msra.mxu0 %v1302
  %1442 = vmatprep.subr.mxu0 0.0
  %1443 = vmatpush1.msra.mxu0 %v1303
  %1444 = vmatprep.subr.mxu0 0.0
  %1445 = vmatpush1.msra.mxu0 0.0
  %1446 = vmatprep.subr.mxu0 0.0
  %1447 = vmatpush1.msra.mxu0 0.0
  %1448 = vmatprep.subr.mxu0 0.0
  %1449 = vmatpush1.msra.mxu0 0.0
  %1450 = vmatprep.subr.mxu0 0.0
  %1451 = vmatpush1.msra.mxu0 0.0
  %1452 = vmatprep.subr.mxu0 0.0
  %1453 = vmatpush1.msra.mxu0 0.0
  %1454 = vmatprep.subr.mxu0 0.0
  %1455 = vmatpush1.msra.mxu0 0.0
  %1456 = vmatprep.subr.mxu0 0.0
  %1457 = vmatpush1.msra.mxu0 0.0
  %1458 = vmatprep.subr.mxu0 0.0
  %1459 = vmatpush1.msra.mxu0 0.0
  %1460 = vmatprep.subr.mxu0 0.0
  %1461 = vmatpush1.msra.mxu0 0.0
  %1462 = vmatprep.subr.mxu0 0.0
  %1463 = vmatpush1.msra.mxu0 0.0
  %1464 = vmatprep.subr.mxu0 0.0
  %1465 = vmatpush1.msra.mxu0 0.0
  %1466 = vmatprep.subr.mxu0 0.0
  %1467 = vmatpush1.msra.mxu0 0.0
  %1468 = vmatprep.subr.mxu0 0.0
  %1469 = vmatpush1.msra.mxu0 0.0
  %1470 = vmatprep.subr.mxu0 0.0
  %1471 = vmatpush1.msra.mxu0 0.0
  %1472 = vmatprep.subr.mxu0 0.0
  %1473 = vmatpush1.msra.mxu0 0.0
  %1474 = vmatprep.subr.mxu0 0.0
  %1475 = vmatpush1.msra.mxu0 0.0
  %1476 = vmatprep.subr.mxu0 0.0
  %1477 = vmatpush1.msra.mxu0 0.0
  %1478 = vmatprep.subr.mxu0 0.0
  %1479 = vmatpush1.msra.mxu0 0.0
  %1480 = vmatprep.subr.mxu0 0.0
  %1481 = vmatpush1.msra.mxu0 0.0
  %1482 = vmatprep.subr.mxu0 0.0
  %1483 = vmatpush1.msra.mxu0 0.0
  %1484 = vmatprep.subr.mxu0 0.0
  %1485 = vmatpush1.msra.mxu0 0.0
  %1486 = vmatprep.subr.mxu0 0.0
  %1487 = vmatpush1.msra.mxu0 0.0
  %1488 = vmatprep.subr.mxu0 0.0
  %1489 = vmatpush1.msra.mxu0 0.0
  %1490 = vmatprep.subr.mxu0 0.0
  %1491 = vmatpush1.msra.mxu0 0.0
  %1492 = vmatprep.mubr.f32.mxu0 0.0
  %1493 = vmatmul.mubr.f32.gmra.mrb[0].mxu0 %v1426
  %v1494 = vpop.f32.mrb[0].mxu0
  %v1495 = vadd.f32 %v1398, %v1494
  %v1496 = vpop.f32.mrb[0].mxu0
  %1497 = vmatprep.mubr.f32.mxu0 0.0
  %1498 = vmatmul.mubr.f32.gmra.mrb[0].mxu0 %v1314
  %v1499 = vpop.f32.mrb[0].mxu0
  %v1500 = vadd.f32 %v1403, %v1499
  %v1501 = vpop.f32.mrb[0].mxu0
  %1502 = vmatprep.mubr.f32.mxu0 0.0
  %1503 = vmatmul.mubr.f32.gmra.mrb[0].mxu0 %v1317
  %v1504 = vpop.f32.mrb[0].mxu0
  %v1505 = vadd.f32 %v1408, %v1504
  %v1506 = vpop.f32.mrb[0].mxu0
  %1507 = vmatprep.mubr.f32.mxu0 0.0
  %1508 = vmatmul.mubr.f32.gmra.mrb[0].mxu0 %v1320
  %v1509 = vpop.f32.mrb[0].mxu0
  %v1510 = vadd.f32 %v1413, %v1509
  %v1511 = vpop.f32.mrb[0].mxu0
  %1512 = vmatprep.mubr.f32.mxu0 0.0
  %1513 = vmatmul.mubr.f32.gmra.mrb[0].mxu0 %v1323
  %v1514 = vpop.f32.mrb[0].mxu0
  %v1515 = vadd.f32 %v1418, %v1514
  %v1516 = vpop.f32.mrb[0].mxu0
  %1517 = vmatprep.mubr.f32.mxu0 0.0
  %1518 = vmatmul.mubr.f32.gmra.mrb[0].mxu0 %v1326
  %v1519 = vpop.f32.mrb[0].mxu0
  %v1520 = vadd.f32 %v1423, %v1519
  %v1521 = vpop.f32.mrb[0].mxu0
  %1522 = vdwg.mxu0
  %v1523 = vld [vmem:[%s11] sm:$0xff]
  %v1524 = vld [vmem:[%s11 + $0x8] sm:$0xff]
  %v1525 = vld [vmem:[%s11 + $0x10] sm:$0xff]
  %v1526 = vld [vmem:[%s11 + $0x18] sm:$0xff]
  %v1527 = vld [vmem:[%s11 + $0x20] sm:$0xff]
  %v1528 = vld [vmem:[%s11 + $0x28] sm:$0xff]
  %v1529 = vld [vmem:[%s11 + $0x30] sm:$0xff]
  %v1530 = vld [vmem:[%s11 + $0x38] sm:$0xff]
  %1531 = vmatprep.subr.mxu0 0.0
  %1532 = vmatpush1.msra.mxu0 %v1523
  %1533 = vmatprep.subr.mxu0 0.0
  %1534 = vmatpush1.msra.mxu0 %v1524
  %1535 = vmatprep.subr.mxu0 0.0
  %1536 = vmatpush1.msra.mxu0 %v1525
  %1537 = vmatprep.subr.mxu0 0.0
  %1538 = vmatpush1.msra.mxu0 %v1526
  %1539 = vmatprep.subr.mxu0 0.0
  %1540 = vmatpush1.msra.mxu0 %v1527
  %1541 = vmatprep.subr.mxu0 0.0
  %1542 = vmatpush1.msra.mxu0 %v1528
  %1543 = vmatprep.subr.mxu0 0.0
  %1544 = vmatpush1.msra.mxu0 %v1529
  %1545 = vmatprep.subr.mxu0 0.0
  %1546 = vmatpush1.msra.mxu0 %v1530
  %1547 = vmatprep.subr.mxu0 0.0
  %1548 = vmatpush1.msra.mxu0 0.0
  %1549 = vmatprep.subr.mxu0 0.0
  %1550 = vmatpush1.msra.mxu0 0.0
  %1551 = vmatprep.subr.mxu0 0.0
  %1552 = vmatpush1.msra.mxu0 0.0
  %1553 = vmatprep.subr.mxu0 0.0
  %1554 = vmatpush1.msra.mxu0 0.0
  %1555 = vmatprep.subr.mxu0 0.0
  %1556 = vmatpush1.msra.mxu0 0.0
  %1557 = vmatprep.subr.mxu0 0.0
  %1558 = vmatpush1.msra.mxu0 0.0
  %1559 = vmatprep.subr.mxu0 0.0
  %1560 = vmatpush1.msra.mxu0 0.0
  %1561 = vmatprep.subr.mxu0 0.0
  %1562 = vmatpush1.msra.mxu0 0.0
  %1563 = vmatprep.subr.mxu0 0.0
  %1564 = vmatpush1.msra.mxu0 0.0
  %1565 = vmatprep.subr.mxu0 0.0
  %1566 = vmatpush1.msra.mxu0 0.0
  %1567 = vmatprep.subr.mxu0 0.0
  %1568 = vmatpush1.msra.mxu0 0.0
  %1569 = vmatprep.subr.mxu0 0.0
  %1570 = vmatpush1.msra.mxu0 0.0
  %1571 = vmatprep.subr.mxu0 0.0
  %1572 = vmatpush1.msra.mxu0 0.0
  %1573 = vmatprep.subr.mxu0 0.0
  %1574 = vmatpush1.msra.mxu0 0.0
  %1575 = vmatprep.subr.mxu0 0.0
  %1576 = vmatpush1.msra.mxu0 0.0
  %1577 = vmatprep.subr.mxu0 0.0
  %1578 = vmatpush1.msra.mxu0 0.0
  %1579 = vmatprep.subr.mxu0 0.0
  %1580 = vmatpush1.msra.mxu0 0.0
  %1581 = vmatprep.subr.mxu0 0.0
  %1582 = vmatpush1.msra.mxu0 0.0
  %1583 = vmatprep.subr.mxu0 0.0
  %1584 = vmatpush1.msra.mxu0 0.0
  %1585 = vmatprep.subr.mxu0 0.0
  %1586 = vmatpush1.msra.mxu0 0.0
  %1587 = vmatprep.subr.mxu0 0.0
  %1588 = vmatpush1.msra.mxu0 0.0
  %1589 = vmatprep.subr.mxu0 0.0
  %1590 = vmatpush1.msra.mxu0 0.0
  %1591 = vmatprep.subr.mxu0 0.0
  %1592 = vmatpush1.msra.mxu0 0.0
  %1593 = vmatprep.subr.mxu0 0.0
  %1594 = vmatpush1.msra.mxu0 0.0
  %1595 = vmatprep.mubr.f32.mxu0 0.0
  %1596 = vmatmul.mubr.f32.gmra.mrb[0].mxu0 %v1317
  %v1597 = vpop.f32.mrb[0].mxu0
  %v1598 = vadd.f32 0.0, %v1597
  %v1599 = vpop.f32.mrb[0].mxu0
  %1600 = vmatprep.mubr.f32.mxu0 0.0
  %1601 = vmatmul.mubr.f32.gmra.mrb[0].mxu0 %v1320
  %v1602 = vpop.f32.mrb[0].mxu0
  %v1603 = vadd.f32 0.0, %v1602
  %v1604 = vpop.f32.mrb[0].mxu0
  %1605 = vmatprep.mubr.f32.mxu0 0.0
  %1606 = vmatmul.mubr.f32.gmra.mrb[0].mxu0 %v1323
  %v1607 = vpop.f32.mrb[0].mxu0
  %v1608 = vadd.f32 0.0, %v1607
  %v1609 = vpop.f32.mrb[0].mxu0
  %1610 = vmatprep.mubr.f32.mxu0 0.0
  %1611 = vmatmul.mubr.f32.gmra.mrb[0].mxu0 %v1326
  %v1612 = vpop.f32.mrb[0].mxu0
  %v1613 = vadd.f32 0.0, %v1612
  %v1614 = vpop.f32.mrb[0].mxu0
  %1615 = vmatprep.mubr.f32.mxu0 0.0
  %1616 = vmatmul.mubr.f32.gmra.mrb[0].mxu0 %v1329
  %v1617 = vpop.f32.mrb[0].mxu0
  %v1618 = vadd.f32 0.0, %v1617
  %v1619 = vpop.f32.mrb[0].mxu0
  %1620 = vmatprep.mubr.f32.mxu0 0.0
  %1621 = vmatmul.mubr.f32.gmra.mrb[0].mxu0 %v1426
  %v1622 = vpop.f32.mrb[0].mxu0
  %v1623 = vadd.f32 0.0, %v1622
  %v1624 = vpop.f32.mrb[0].mxu0
  %1625 = vdwg.mxu0
  %v1626 = vadd.f32 %v1495, %v1598
  %v1627 = vadd.f32 %v1500, %v1603
  %v1628 = vadd.f32 %v1505, %v1608
  %v1629 = vadd.f32 %v1510, %v1613
  %v1630 = vadd.f32 %v1515, %v1618
  %v1631 = vadd.f32 %v1520, %v1623
  %v1632 = vld [vmem:[%s12] sm:$0x1]
  %v1634 = vlaneseq
  %v1635 = vshrl.u32 %v1634, 7
  %v1636 = vsub.s32 0, %v1635
  %v1637 = vrot.slane %v1632, %v1636
  %v1639 = vadd.f32 %v1626, %v1637
  %v1640 = vadd.f32 %v1627, %v1637
  %v1641 = vadd.f32 %v1628, %v1637
  %v1642 = vadd.f32 %v1629, %v1637
  %v1643 = vadd.f32 %v1630, %v1637
  %v1644 = vadd.f32 %v1631, %v1637
  %v1645 = vmax.f32 %v1639, 0.0
  %v1646 = vmax.f32 %v1640, 0.0
  %v1647 = vmax.f32 %v1641, 0.0
  %v1648 = vmax.f32 %v1642, 0.0
  %v1649 = vmax.f32 %v1643, 0.0
  %v1650 = vmax.f32 %v1644, 0.0
  %v1651 = vmax.f32 %v1645, %v1646
  %v1652 = vmax.f32 %v1647, %v1648
  %v1653 = vmax.f32 %v1649, %v1650
  %v1654 = vld [vmem:[%s13] sm:$0xff]
  %v1655 = vld [vmem:[%s13 + $0x8] sm:$0xff]
  %v1656 = vld [vmem:[%s13 + $0x10] sm:$0xff]
  %v1657 = vld [vmem:[%s13 + $0x18] sm:$0xff]
  %v1658 = vld [vmem:[%s13 + $0x20] sm:$0xff]
  %v1659 = vld [vmem:[%s13 + $0x28] sm:$0xff]
  %v1660 = vld [vmem:[%s13 + $0x30] sm:$0xff]
  %v1661 = vld [vmem:[%s13 + $0x38] sm:$0xff]
  %v1662 = vld [vmem:[%s13 + $0x40] sm:$0xff]
  %v1663 = vld [vmem:[%s13 + $0x48] sm:$0xff]
  %v1664 = vld [vmem:[%s13 + $0x50] sm:$0xff]
  %v1665 = vld [vmem:[%s13 + $0x58] sm:$0xff]
  %v1666 = vld [vmem:[%s13 + $0x60] sm:$0xff]
  %v1667 = vld [vmem:[%s13 + $0x68] sm:$0xff]
  %v1668 = vld [vmem:[%s13 + $0x70] sm:$0xff]
  %v1669 = vld [vmem:[%s13 + $0x78] sm:$0xff]
  %v1670 = vld [vmem:[%s14] sm:$0xff]
  %v1671 = vld [vmem:[%s14 + $0x8] sm:$0xff]
  %v1672 = vld [vmem:[%s14 + $0x10] sm:$0xff]
  %v1673 = vld [vmem:[%s14 + $0x18] sm:$0xff]
  %v1674 = vld [vmem:[%s14 + $0x20] sm:$0xff]
  %v1675 = vld [vmem:[%s14 + $0x28] sm:$0xff]
  %v1676 = vld [vmem:[%s14 + $0x30] sm:$0xff]
  %v1677 = vld [vmem:[%s14 + $0x38] sm:$0xff]
  %v1678 = vld [vmem:[%s14 + $0x40] sm:$0xff]
  %v1679 = vld [vmem:[%s14 + $0x48] sm:$0xff]
  %v1680 = vld [vmem:[%s14 + $0x50] sm:$0xff]
  %v1681 = vld [vmem:[%s14 + $0x58] sm:$0xff]
  %v1682 = vld [vmem:[%s14 + $0x60] sm:$0xff]
  %v1683 = vld [vmem:[%s14 + $0x68] sm:$0xff]
  %v1684 = vld [vmem:[%s14 + $0x70] sm:$0xff]
  %v1685 = vld [vmem:[%s14 + $0x78] sm:$0xff]
  %1686 = vmatprep.subr.mxu0 0.0
  %1687 = vmatpush1.msra.mxu0 %v1670
  %1688 = vmatprep.subr.mxu0 0.0
  %1689 = vmatpush1.msra.mxu0 %v1671
  %1690 = vmatprep.subr.mxu0 0.0
  %1691 = vmatpush1.msra.mxu0 %v1672
  %1692 = vmatprep.subr.mxu0 0.0
  %1693 = vmatpush1.msra.mxu0 %v1673
  %1694 = vmatprep.subr.mxu0 0.0
  %1695 = vmatpush1.msra.mxu0 %v1674
  %1696 = vmatprep.subr.mxu0 0.0
  %1697 = vmatpush1.msra.mxu0 %v1675
  %1698 = vmatprep.subr.mxu0 0.0
  %1699 = vmatpush1.msra.mxu0 %v1676
  %1700 = vmatprep.subr.mxu0 0.0
  %1701 = vmatpush1.msra.mxu0 %v1677
  %1702 = vmatprep.subr.mxu0 0.0
  %1703 = vmatpush1.msra.mxu0 %v1678
  %1704 = vmatprep.subr.mxu0 0.0
  %1705 = vmatpush1.msra.mxu0 %v1679
  %1706 = vmatprep.subr.mxu0 0.0
  %1707 = vmatpush1.msra.mxu0 %v1680
  %1708 = vmatprep.subr.mxu0 0.0
  %1709 = vmatpush1.msra.mxu0 %v1681
  %1710 = vmatprep.subr.mxu0 0.0
  %1711 = vmatpush1.msra.mxu0 %v1682
  %1712 = vmatprep.subr.mxu0 0.0
  %1713 = vmatpush1.msra.mxu0 %v1683
  %1714 = vmatprep.subr.mxu0 0.0
  %1715 = vmatpush1.msra.mxu0 %v1684
  %1716 = vmatprep.subr.mxu0 0.0
  %1717 = vmatpush1.msra.mxu0 %v1685
  %1718 = vmatprep.subr.mxu0 0.0
  %1719 = vmatpush1.msra.mxu0 0.0
  %1720 = vmatprep.subr.mxu0 0.0
  %1721 = vmatpush1.msra.mxu0 0.0
  %1722 = vmatprep.subr.mxu0 0.0
  %1723 = vmatpush1.msra.mxu0 0.0
  %1724 = vmatprep.subr.mxu0 0.0
  %1725 = vmatpush1.msra.mxu0 0.0
  %1726 = vmatprep.subr.mxu0 0.0
  %1727 = vmatpush1.msra.mxu0 0.0
  %1728 = vmatprep.subr.mxu0 0.0
  %1729 = vmatpush1.msra.mxu0 0.0
  %1730 = vmatprep.subr.mxu0 0.0
  %1731 = vmatpush1.msra.mxu0 0.0
  %1732 = vmatprep.subr.mxu0 0.0
  %1733 = vmatpush1.msra.mxu0 0.0
  %1734 = vmatprep.subr.mxu0 0.0
  %1735 = vmatpush1.msra.mxu0 0.0
  %1736 = vmatprep.subr.mxu0 0.0
  %1737 = vmatpush1.msra.mxu0 0.0
  %1738 = vmatprep.subr.mxu0 0.0
  %1739 = vmatpush1.msra.mxu0 0.0
  %1740 = vmatprep.subr.mxu0 0.0
  %1741 = vmatpush1.msra.mxu0 0.0
  %1742 = vmatprep.subr.mxu0 0.0
  %1743 = vmatpush1.msra.mxu0 0.0
  %1744 = vmatprep.subr.mxu0 0.0
  %1745 = vmatpush1.msra.mxu0 0.0
  %1746 = vmatprep.subr.mxu0 0.0
  %1747 = vmatpush1.msra.mxu0 0.0
  %1748 = vmatprep.subr.mxu0 0.0
  %1749 = vmatpush1.msra.mxu0 0.0
  %1750 = vmatprep.mubr.f32.mxu0 0.0
  %1751 = vmatmul.mubr.f32.gmra.mrb[0].mxu0 %v1652
  %v1752 = vpop.f32.mrb[0].mxu0
  %v1753 = vadd.f32 0.0, %v1752
  %v1754 = vpop.f32.mrb[0].mxu0
  %1755 = vdwg.mxu0
  %1756 = vmatprep.subr.mxu0 0.0
  %1757 = vmatpush1.msra.mxu0 %v1654
  %1758 = vmatprep.subr.mxu0 0.0
  %1759 = vmatpush1.msra.mxu0 %v1655
  %1760 = vmatprep.subr.mxu0 0.0
  %1761 = vmatpush1.msra.mxu0 %v1656
  %1762 = vmatprep.subr.mxu0 0.0
  %1763 = vmatpush1.msra.mxu0 %v1657
  %1764 = vmatprep.subr.mxu0 0.0
  %1765 = vmatpush1.msra.mxu0 %v1658
  %1766 = vmatprep.subr.mxu0 0.0
  %1767 = vmatpush1.msra.mxu0 %v1659
  %1768 = vmatprep.subr.mxu0 0.0
  %1769 = vmatpush1.msra.mxu0 %v1660
  %1770 = vmatprep.subr.mxu0 0.0
  %1771 = vmatpush1.msra.mxu0 %v1661
  %1772 = vmatprep.subr.mxu0 0.0
  %1773 = vmatpush1.msra.mxu0 %v1662
  %1774 = vmatprep.subr.mxu0 0.0
  %1775 = vmatpush1.msra.mxu0 %v1663
  %1776 = vmatprep.subr.mxu0 0.0
  %1777 = vmatpush1.msra.mxu0 %v1664
  %1778 = vmatprep.subr.mxu0 0.0
  %1779 = vmatpush1.msra.mxu0 %v1665
  %1780 = vmatprep.subr.mxu0 0.0
  %1781 = vmatpush1.msra.mxu0 %v1666
  %1782 = vmatprep.subr.mxu0 0.0
  %1783 = vmatpush1.msra.mxu0 %v1667
  %1784 = vmatprep.subr.mxu0 0.0
  %1785 = vmatpush1.msra.mxu0 %v1668
  %1786 = vmatprep.subr.mxu0 0.0
  %1787 = vmatpush1.msra.mxu0 %v1669
  %1788 = vmatprep.subr.mxu0 0.0
  %1789 = vmatpush1.msra.mxu0 0.0
  %1790 = vmatprep.subr.mxu0 0.0
  %1791 = vmatpush1.msra.mxu0 0.0
  %1792 = vmatprep.subr.mxu0 0.0
  %1793 = vmatpush1.msra.mxu0 0.0
  %1794 = vmatprep.subr.mxu0 0.0
  %1795 = vmatpush1.msra.mxu0 0.0
  %1796 = vmatprep.subr.mxu0 0.0
  %1797 = vmatpush1.msra.mxu0 0.0
  %1798 = vmatprep.subr.mxu0 0.0
  %1799 = vmatpush1.msra.mxu0 0.0
  %1800 = vmatprep.subr.mxu0 0.0
  %1801 = vmatpush1.msra.mxu0 0.0
  %1802 = vmatprep.subr.mxu0 0.0
  %1803 = vmatpush1.msra.mxu0 0.0
  %1804 = vmatprep.subr.mxu0 0.0
  %1805 = vmatpush1.msra.mxu0 0.0
  %1806 = vmatprep.subr.mxu0 0.0
  %1807 = vmatpush1.msra.mxu0 0.0
  %1808 = vmatprep.subr.mxu0 0.0
  %1809 = vmatpush1.msra.mxu0 0.0
  %1810 = vmatprep.subr.mxu0 0.0
  %1811 = vmatpush1.msra.mxu0 0.0
  %1812 = vmatprep.subr.mxu0 0.0
  %1813 = vmatpush1.msra.mxu0 0.0
  %1814 = vmatprep.subr.mxu0 0.0
  %1815 = vmatpush1.msra.mxu0 0.0
  %1816 = vmatprep.subr.mxu0 0.0
  %1817 = vmatpush1.msra.mxu0 0.0
  %1818 = vmatprep.subr.mxu0 0.0
  %1819 = vmatpush1.msra.mxu0 0.0
  %1820 = vmatprep.mubr.f32.mxu0 0.0
  %1821 = vmatmul.mubr.f32.gmra.mrb[0].mxu0 %v1651
  %v1822 = vpop.f32.mrb[0].mxu0
  %v1823 = vadd.f32 %v1753, %v1822
  %v1824 = vpop.f32.mrb[0].mxu0
  %1825 = vdwg.mxu0
  %v1826 = vld [vmem:[%s15] sm:$0xff]
  %v1827 = vld [vmem:[%s15 + $0x8] sm:$0xff]
  %v1828 = vld [vmem:[%s15 + $0x10] sm:$0xff]
  %v1829 = vld [vmem:[%s15 + $0x18] sm:$0xff]
  %v1830 = vld [vmem:[%s15 + $0x20] sm:$0xff]
  %v1831 = vld [vmem:[%s15 + $0x28] sm:$0xff]
  %v1832 = vld [vmem:[%s15 + $0x30] sm:$0xff]
  %v1833 = vld [vmem:[%s15 + $0x38] sm:$0xff]
  %v1834 = vld [vmem:[%s15 + $0x40] sm:$0xff]
  %v1835 = vld [vmem:[%s15 + $0x48] sm:$0xff]
  %v1836 = vld [vmem:[%s15 + $0x50] sm:$0xff]
  %v1837 = vld [vmem:[%s15 + $0x58] sm:$0xff]
  %v1838 = vld [vmem:[%s15 + $0x60] sm:$0xff]
  %v1839 = vld [vmem:[%s15 + $0x68] sm:$0xff]
  %v1840 = vld [vmem:[%s15 + $0x70] sm:$0xff]
  %v1841 = vld [vmem:[%s15 + $0x78] sm:$0xff]
  %1842 = vmatprep.subr.mxu0 0.0
  %1843 = vmatpush1.msra.mxu0 %v1826
  %1844 = vmatprep.subr.mxu0 0.0
  %1845 = vmatpush1.msra.mxu0 %v1827
  %1846 = vmatprep.subr.mxu0 0.0
  %1847 = vmatpush1.msra.mxu0 %v1828
  %1848 = vmatprep.subr.mxu0 0.0
  %1849 = vmatpush1.msra.mxu0 %v1829
  %1850 = vmatprep.subr.mxu0 0.0
  %1851 = vmatpush1.msra.mxu0 %v1830
  %1852 = vmatprep.subr.mxu0 0.0
  %1853 = vmatpush1.msra.mxu0 %v1831
  %1854 = vmatprep.subr.mxu0 0.0
  %1855 = vmatpush1.msra.mxu0 %v1832
  %1856 = vmatprep.subr.mxu0 0.0
  %1857 = vmatpush1.msra.mxu0 %v1833
  %1858 = vmatprep.subr.mxu0 0.0
  %1859 = vmatpush1.msra.mxu0 %v1834
  %1860 = vmatprep.subr.mxu0 0.0
  %1861 = vmatpush1.msra.mxu0 %v1835
  %1862 = vmatprep.subr.mxu0 0.0
  %1863 = vmatpush1.msra.mxu0 %v1836
  %1864 = vmatprep.subr.mxu0 0.0
  %1865 = vmatpush1.msra.mxu0 %v1837
  %1866 = vmatprep.subr.mxu0 0.0
  %1867 = vmatpush1.msra.mxu0 %v1838
  %1868 = vmatprep.subr.mxu0 0.0
  %1869 = vmatpush1.msra.mxu0 %v1839
  %1870 = vmatprep.subr.mxu0 0.0
  %1871 = vmatpush1.msra.mxu0 %v1840
  %1872 = vmatprep.subr.mxu0 0.0
  %1873 = vmatpush1.msra.mxu0 %v1841
  %1874 = vmatprep.subr.mxu0 0.0
  %1875 = vmatpush1.msra.mxu0 0.0
  %1876 = vmatprep.subr.mxu0 0.0
  %1877 = vmatpush1.msra.mxu0 0.0
  %1878 = vmatprep.subr.mxu0 0.0
  %1879 = vmatpush1.msra.mxu0 0.0
  %1880 = vmatprep.subr.mxu0 0.0
  %1881 = vmatpush1.msra.mxu0 0.0
  %1882 = vmatprep.subr.mxu0 0.0
  %1883 = vmatpush1.msra.mxu0 0.0
  %1884 = vmatprep.subr.mxu0 0.0
  %1885 = vmatpush1.msra.mxu0 0.0
  %1886 = vmatprep.subr.mxu0 0.0
  %1887 = vmatpush1.msra.mxu0 0.0
  %1888 = vmatprep.subr.mxu0 0.0
  %1889 = vmatpush1.msra.mxu0 0.0
  %1890 = vmatprep.subr.mxu0 0.0
  %1891 = vmatpush1.msra.mxu0 0.0
  %1892 = vmatprep.subr.mxu0 0.0
  %1893 = vmatpush1.msra.mxu0 0.0
  %1894 = vmatprep.subr.mxu0 0.0
  %1895 = vmatpush1.msra.mxu0 0.0
  %1896 = vmatprep.subr.mxu0 0.0
  %1897 = vmatpush1.msra.mxu0 0.0
  %1898 = vmatprep.subr.mxu0 0.0
  %1899 = vmatpush1.msra.mxu0 0.0
  %1900 = vmatprep.subr.mxu0 0.0
  %1901 = vmatpush1.msra.mxu0 0.0
  %1902 = vmatprep.subr.mxu0 0.0
  %1903 = vmatpush1.msra.mxu0 0.0
  %1904 = vmatprep.subr.mxu0 0.0
  %1905 = vmatpush1.msra.mxu0 0.0
  %1906 = vmatprep.mubr.f32.mxu0 0.0
  %1907 = vmatmul.mubr.f32.gmra.mrb[0].mxu0 %v1653
  %v1908 = vpop.f32.mrb[0].mxu0
  %v1909 = vadd.f32 0.0, %v1908
  %v1910 = vpop.f32.mrb[0].mxu0
  %1911 = vdwg.mxu0
  %v1912 = vadd.f32 %v1823, %v1909
  %v1913 = vld [vmem:[%s16] sm:$0x1]
  %v1915 = vlaneseq
  %v1916 = vshrl.u32 %v1915, 7
  %v1917 = vsub.s32 0, %v1916
  %v1918 = vrot.slane %v1913, %v1917
  %v1920 = vadd.f32 %v1912, %v1918
  %v1921 = vmax.f32 %v1920, 0.0
  %v1922 = vld [vmem:[%s17] sm:$0xff]
  %v1923 = vld [vmem:[%s17 + $0x8] sm:$0xff]
  %v1924 = vld [vmem:[%s17 + $0x10] sm:$0xff]
  %v1925 = vld [vmem:[%s17 + $0x18] sm:$0xff]
  %v1926 = vld [vmem:[%s17 + $0x20] sm:$0xff]
  %v1927 = vld [vmem:[%s17 + $0x28] sm:$0xff]
  %v1928 = vld [vmem:[%s17 + $0x30] sm:$0xff]
  %v1929 = vld [vmem:[%s17 + $0x38] sm:$0xff]
  %v1930 = vld [vmem:[%s18] sm:$0x1]
  %v1932 = vlaneseq
  %v1933 = vshrl.u32 %v1932, 7
  %v1934 = vsub.s32 0, %v1933
  %v1935 = vrot.slane %v1930, %v1934
  %v1938 = vsel %vm1312, %v1921, 0
  %1940 = vmatprep.subr.mxu0 0.0
  %1941 = vmatpush1.msra.mxu0 %v1922
  %1942 = vmatprep.subr.mxu0 0.0
  %1943 = vmatpush1.msra.mxu0 %v1923
  %1944 = vmatprep.subr.mxu0 0.0
  %1945 = vmatpush1.msra.mxu0 %v1924
  %1946 = vmatprep.subr.mxu0 0.0
  %1947 = vmatpush1.msra.mxu0 %v1925
  %1948 = vmatprep.subr.mxu0 0.0
  %1949 = vmatpush1.msra.mxu0 %v1926
  %1950 = vmatprep.subr.mxu0 0.0
  %1951 = vmatpush1.msra.mxu0 %v1927
  %1952 = vmatprep.subr.mxu0 0.0
  %1953 = vmatpush1.msra.mxu0 %v1928
  %1954 = vmatprep.subr.mxu0 0.0
  %1955 = vmatpush1.msra.mxu0 %v1929
  %1956 = vmatprep.subr.mxu0 0.0
  %1957 = vmatpush1.msra.mxu0 0.0
  %1958 = vmatprep.subr.mxu0 0.0
  %1959 = vmatpush1.msra.mxu0 0.0
  %1960 = vmatprep.subr.mxu0 0.0
  %1961 = vmatpush1.msra.mxu0 0.0
  %1962 = vmatprep.subr.mxu0 0.0
  %1963 = vmatpush1.msra.mxu0 0.0
  %1964 = vmatprep.subr.mxu0 0.0
  %1965 = vmatpush1.msra.mxu0 0.0
  %1966 = vmatprep.subr.mxu0 0.0
  %1967 = vmatpush1.msra.mxu0 0.0
  %1968 = vmatprep.subr.mxu0 0.0
  %1969 = vmatpush1.msra.mxu0 0.0
  %1970 = vmatprep.subr.mxu0 0.0
  %1971 = vmatpush1.msra.mxu0 0.0
  %1972 = vmatprep.subr.mxu0 0.0
  %1973 = vmatpush1.msra.mxu0 0.0
  %1974 = vmatprep.subr.mxu0 0.0
  %1975 = vmatpush1.msra.mxu0 0.0
  %1976 = vmatprep.subr.mxu0 0.0
  %1977 = vmatpush1.msra.mxu0 0.0
  %1978 = vmatprep.subr.mxu0 0.0
  %1979 = vmatpush1.msra.mxu0 0.0
  %1980 = vmatprep.subr.mxu0 0.0
  %1981 = vmatpush1.msra.mxu0 0.0
  %1982 = vmatprep.subr.mxu0 0.0
  %1983 = vmatpush1.msra.mxu0 0.0
  %1984 = vmatprep.subr.mxu0 0.0
  %1985 = vmatpush1.msra.mxu0 0.0
  %1986 = vmatprep.subr.mxu0 0.0
  %1987 = vmatpush1.msra.mxu0 0.0
  %1988 = vmatprep.subr.mxu0 0.0
  %1989 = vmatpush1.msra.mxu0 0.0
  %1990 = vmatprep.subr.mxu0 0.0
  %1991 = vmatpush1.msra.mxu0 0.0
  %1992 = vmatprep.subr.mxu0 0.0
  %1993 = vmatpush1.msra.mxu0 0.0
  %1994 = vmatprep.subr.mxu0 0.0
  %1995 = vmatpush1.msra.mxu0 0.0
  %1996 = vmatprep.subr.mxu0 0.0
  %1997 = vmatpush1.msra.mxu0 0.0
  %1998 = vmatprep.subr.mxu0 0.0
  %1999 = vmatpush1.msra.mxu0 0.0
  %2000 = vmatprep.subr.mxu0 0.0
  %2001 = vmatpush1.msra.mxu0 0.0
  %2002 = vmatprep.subr.mxu0 0.0
  %2003 = vmatpush1.msra.mxu0 0.0
  %2004 = vmatprep.mubr.f32.mxu0 0.0
  %2005 = vmatmul.mubr.f32.gmra.mrb[0].mxu0 %v1938
  %v2006 = vpop.f32.mrb[0].mxu0
  %v2007 = vadd.f32 %v1935, %v2006
  %v2008 = vpop.f32.mrb[0].mxu0
  %2009 = vdwg.mxu0
  %v2010 = vxor.u32 %v2007, 2147483648
  %v2011 = vmul.f32 %v2010, 1.442695
  %v2012 = vpow.pop %v2011
  %v2013 = vadd.f32 %v2012, 1.0
  %v2014 = vrcp.pop %v2013
  %v2015 = vmul.f32 1.0, %v2014
  %2016 = vst.msk [vmem:[%s19] sm:$0xff] %vm88, %v2015
  // Predicated region
  $region78: #{tpu_custom_call.1} parent=0 // pred_check
    _
  $region79: #{tpu_custom_call.1} parent=0 // pred_check_branch
    %2018 = sbr.rel (0) target = $region81
  $region80: #{tpu_custom_call.1} parent=0 // pred_region
    _
  $region81: #{tpu_custom_call.1} parent=0 // pred_fallthru
    _
  // Predicated region
  $region82: #{tpu_custom_call.1} parent=0 // pred_check
    _
  $region83: #{tpu_custom_call.1} parent=0 // pred_check_branch
    %2020 = sbr.rel (0) target = $region85
  $region84: #{tpu_custom_call.1} parent=0 // pred_region
    _
  $region85: #{tpu_custom_call.1} parent=0 // pred_fallthru
    _

</llo_original>
